<compile_context>
chip_gen: v7x
topology: tpu7x:2x2x1
jax: 0.10.0
libtpu: 0.0.40
codegen_flags: <defaults>
</compile_context>

<pallas_src>
import math

import jax
import jax.numpy as jnp
from jax.experimental import pallas as pl
from jax.experimental.pallas import tpu as pltpu

IN_DIM = 28 * 28        # 784
HID_DIM = 500
HID_PAD = 512           # lane-aligned hidden
OUT_DIM = 10
OUT_PAD = 128           # lane-dense output slab


def _round_up(x, m):
    return (x + m - 1) // m * m


def mlp_kernel(x_ref, w1_ref, b1_ref, w2_ref, b2_ref, o_ref):
    # fc1: (TILE_N, 784)bf16 @ (784, 512)bf16 -> f32 accum, + bias, ReLU
    h = jnp.dot(x_ref[...], w1_ref[...], preferred_element_type=jnp.float32)
    h = jnp.maximum(h + b1_ref[...], 0.0)
    # fc2: (TILE_N, 512)bf16 @ (512, 128)bf16 -> f32 accum, + bias
    o = jnp.dot(h.astype(jnp.bfloat16), w2_ref[...],
                preferred_element_type=jnp.float32)
    o_ref[...] = o + b2_ref[...]


def net_forward(x, w1, b1, w2, b2, *, tile_n=512):
    """Forward pass of Net. x is NCHW (N, 1, 28, 28); weights are (in, out)."""
    n = x.shape[0]
    # Glue: x.view(-1, 28*28)
    x2d = x.reshape(n, IN_DIM).astype(jnp.float32)

    # Pick a batch tile: multiple of 8, no larger than needed.
    tile_n = min(tile_n, _round_up(n, 8))
    n_pad = _round_up(n, tile_n)
    if n_pad != n:
        x2d = jnp.pad(x2d, ((0, n_pad - n), (0, 0)))

    # Lane-align hidden (500 -> 512) and output (10 -> 128) with zero padding.
    w1p = jnp.pad(w1, ((0, 0), (0, HID_PAD - HID_DIM))).astype(jnp.bfloat16)
    b1p = jnp.pad(b1, (0, HID_PAD - HID_DIM)).reshape(1, HID_PAD).astype(jnp.float32)
    w2p = jnp.pad(w2, ((0, HID_PAD - HID_DIM), (0, OUT_PAD - OUT_DIM))).astype(jnp.bfloat16)
    b2p = jnp.pad(b2, (0, OUT_PAD - OUT_DIM)).reshape(1, OUT_PAD).astype(jnp.float32)

    x_bf16 = x2d.astype(jnp.bfloat16)

    grid = (n_pad // tile_n,)
    out = pl.pallas_call(
        mlp_kernel,
        out_shape=jax.ShapeDtypeStruct((n_pad, OUT_PAD), jnp.float32),
        grid=grid,
        in_specs=[
            pl.BlockSpec((tile_n, IN_DIM), lambda i: (i, 0)),     # x tile, streamed
            pl.BlockSpec((IN_DIM, HID_PAD), lambda i: (0, 0)),    # W1, resident
            pl.BlockSpec((1, HID_PAD), lambda i: (0, 0)),         # b1, resident
            pl.BlockSpec((HID_PAD, OUT_PAD), lambda i: (0, 0)),   # W2, resident
            pl.BlockSpec((1, OUT_PAD), lambda i: (0, 0)),         # b2, resident
        ],
        out_specs=pl.BlockSpec((tile_n, OUT_PAD), lambda i: (i, 0)),
        compiler_params=pltpu.CompilerParams(
            dimension_semantics=("parallel",),
        ),
    )(x_bf16, w1p, b1p, w2p, b2p)

    # Slice off batch padding and the lane-dense output padding.
    return out[:n, :OUT_DIM]


def init_params(key):
    # Deterministic init mimicking PyTorch nn.Linear default:
    # U(-1/sqrt(fan_in), 1/sqrt(fan_in)) for weight and bias.
    k1, k2, k3, k4 = jax.random.split(key, 4)
    bound1 = 1.0 / math.sqrt(IN_DIM)
    # stored as (in, out) = transpose of PyTorch (out, in)
    w1 = jax.random.uniform(k1, (IN_DIM, HID_DIM), jnp.float32, -bound1, bound1)
    b1 = jax.random.uniform(k2, (HID_DIM,), jnp.float32, -bound1, bound1)
    bound2 = 1.0 / math.sqrt(HID_DIM)
    w2 = jax.random.uniform(k3, (HID_DIM, OUT_DIM), jnp.float32, -bound2, bound2)
    b2 = jax.random.uniform(k4, (OUT_DIM,), jnp.float32, -bound2, bound2)
    return w1, b1, w2, b2


def _ref_forward(x, w1, b1, w2, b2):
    x2d = x.reshape(x.shape[0], IN_DIM)
    return jnp.maximum(x2d @ w1 + b1, 0.0) @ w2 + b2


if __name__ == "__main__":
    key = jax.random.PRNGKey(0)
    kx, kp = jax.random.split(key)

    w1, b1, w2, b2 = init_params(kp)

    # Small batch of MNIST-shaped NCHW inputs.
    batch = 8
    x = jax.random.normal(kx, (batch, 1, 28, 28), jnp.float32)

    out = net_forward(x, w1, b1, w2, b2)
    out = jax.block_until_ready(out)
    assert out.shape == (batch, OUT_DIM)
    ref = _ref_forward(x, w1, b1, w2, b2)
    # bf16 weight/activation feed loosens tolerance vs. the f32 reference.
    assert jnp.allclose(out, ref, atol=5e-2, rtol=5e-2), (
        float(jnp.max(jnp.abs(out - ref))))

    # Second run exercising the multi-step (tiled) grid + batch-padding path.
    batch2 = 40
    x2 = jax.random.normal(jax.random.PRNGKey(1), (batch2, 1, 28, 28), jnp.float32)
    out2 = jax.block_until_ready(net_forward(x2, w1, b1, w2, b2, tile_n=16))
    ref2 = _ref_forward(x2, w1, b1, w2, b2)
    assert out2.shape == (batch2, OUT_DIM)
    assert jnp.allclose(out2, ref2, atol=5e-2, rtol=5e-2), (
        float(jnp.max(jnp.abs(out2 - ref2))))

    print("KERNEL_OK")
</pallas_src>

<mosaic_0001>
module attributes {stable_mosaic.version = 11 : i64} {
  func.func @mlp_kernel(%arg0: i32, %arg1: memref<8x784xbf16, #tpu.memory_space<vmem>>, %arg2: memref<784x512xbf16, #tpu.memory_space<vmem>>, %arg3: memref<1x512xf32, #tpu.memory_space<vmem>>, %arg4: memref<512x128xbf16, #tpu.memory_space<vmem>>, %arg5: memref<1x128xf32, #tpu.memory_space<vmem>>, %arg6: memref<8x128xf32, #tpu.memory_space<vmem>>) attributes {dimension_semantics = [#tpu.dimension_semantics<parallel>], iteration_bounds = array<i64: 1>, scalar_prefetch = 0 : i64, scratch_operands = 0 : i64, tpu.core_type = #tpu.core_type<tc>, window_params = [{transform_indices = @transform_0, window_bounds = array<i64: 8, 784>}, {pipeline_mode = #tpu.pipeline_mode<synchronous>, transform_indices = @transform_1, window_bounds = array<i64: 784, 512>}, {pipeline_mode = #tpu.pipeline_mode<synchronous>, transform_indices = @transform_2, window_bounds = array<i64: 1, 512>}, {pipeline_mode = #tpu.pipeline_mode<synchronous>, transform_indices = @transform_3, window_bounds = array<i64: 512, 128>}, {pipeline_mode = #tpu.pipeline_mode<synchronous>, transform_indices = @transform_4, window_bounds = array<i64: 1, 128>}, {transform_indices = @transform_5, window_bounds = array<i64: 8, 128>}]} {
    %c0 = arith.constant 0 : index
    %c0_0 = arith.constant 0 : index
    %0 = vector.load %arg1[%c0, %c0_0] : memref<8x784xbf16, #tpu.memory_space<vmem>>, vector<8x784xbf16>
    %c0_1 = arith.constant 0 : index
    %c0_2 = arith.constant 0 : index
    %1 = vector.load %arg2[%c0_1, %c0_2] : memref<784x512xbf16, #tpu.memory_space<vmem>>, vector<784x512xbf16>
    %cst = arith.constant dense<0.000000e+00> : vector<8x512xf32>
    %2 = tpu.matmul %0, %1, %cst {dimension_numbers = #tpu.dot_dimension_numbers<[1], [0], [0], [1], [0, 0, 1, 1], [], []>} : vector<8x784xbf16>, vector<784x512xbf16>, vector<8x512xf32> -> vector<8x512xf32>
    %c0_3 = arith.constant 0 : index
    %c0_4 = arith.constant 0 : index
    %3 = vector.load %arg3[%c0_3, %c0_4] : memref<1x512xf32, #tpu.memory_space<vmem>>, vector<1x512xf32>
    %4 = vector.broadcast %3 : vector<1x512xf32> to vector<8x512xf32>
    %5 = arith.addf %2, %4 : vector<8x512xf32>
    %cst_5 = arith.constant 0.000000e+00 : f32
    %6 = vector.broadcast %cst_5 : f32 to vector<8x512xf32>
    %7 = arith.maximumf %5, %6 : vector<8x512xf32>
    %8 = arith.truncf %7 : vector<8x512xf32> to vector<8x512xbf16>
    %c0_6 = arith.constant 0 : index
    %c0_7 = arith.constant 0 : index
    %9 = vector.load %arg4[%c0_6, %c0_7] : memref<512x128xbf16, #tpu.memory_space<vmem>>, vector<512x128xbf16>
    %cst_8 = arith.constant dense<0.000000e+00> : vector<8x128xf32>
    %10 = tpu.matmul %8, %9, %cst_8 {dimension_numbers = #tpu.dot_dimension_numbers<[1], [0], [0], [1], [0, 0, 1, 1], [], []>} : vector<8x512xbf16>, vector<512x128xbf16>, vector<8x128xf32> -> vector<8x128xf32>
    %c0_9 = arith.constant 0 : index
    %c0_10 = arith.constant 0 : index
    %11 = vector.load %arg5[%c0_9, %c0_10] : memref<1x128xf32, #tpu.memory_space<vmem>>, vector<1x128xf32>
    %12 = vector.broadcast %11 : vector<1x128xf32> to vector<8x128xf32>
    %13 = arith.addf %10, %12 : vector<8x128xf32>
    %c0_11 = arith.constant 0 : index
    %c0_12 = arith.constant 0 : index
    %14 = vector.load %arg6[%c0_11, %c0_12] : memref<8x128xf32, #tpu.memory_space<vmem>>, vector<8x128xf32>
    tpu.vector_store %arg6[%c0_11, %c0_12], %13 {strides = array<i32>} : memref<8x128xf32, #tpu.memory_space<vmem>>, vector<8x128xf32>,
    return
  }
  func.func @transform_0(%arg0: i32) -> (i32, i32) {
    %c0_i32 = arith.constant 0 : i32
    %c0_i32_0 = arith.constant 0 : i32
    return %arg0, %c0_i32 : i32, i32
  }
  func.func @transform_1(%arg0: i32) -> (i32, i32) {
    %c0_i32 = arith.constant 0 : i32
    %c0_i32_0 = arith.constant 0 : i32
    %c0_i32_1 = arith.constant 0 : i32
    return %c0_i32, %c0_i32_0 : i32, i32
  }
  func.func @transform_2(%arg0: i32) -> (i32, i32) {
    %c0_i32 = arith.constant 0 : i32
    %c0_i32_0 = arith.constant 0 : i32
    %c0_i32_1 = arith.constant 0 : i32
    return %c0_i32, %c0_i32_0 : i32, i32
  }
  func.func @transform_3(%arg0: i32) -> (i32, i32) {
    %c0_i32 = arith.constant 0 : i32
    %c0_i32_0 = arith.constant 0 : i32
    %c0_i32_1 = arith.constant 0 : i32
    return %c0_i32, %c0_i32_0 : i32, i32
  }
  func.func @transform_4(%arg0: i32) -> (i32, i32) {
    %c0_i32 = arith.constant 0 : i32
    %c0_i32_0 = arith.constant 0 : i32
    %c0_i32_1 = arith.constant 0 : i32
    return %c0_i32, %c0_i32_0 : i32, i32
  }
  func.func @transform_5(%arg0: i32) -> (i32, i32) {
    %c0_i32 = arith.constant 0 : i32
    %c0_i32_0 = arith.constant 0 : i32
    return %arg0, %c0_i32 : i32, i32
  }
}

</mosaic_0001>

<llo_original>
// kernel: tpu_custom_call.1
$region0: #{tpu_custom_call.1}
  #allocation0 [shape = 'u32[]', space=smem, size = 0x4, offset = 0x4, fixed_abs, tag = 'smem constant byte address 0x4 - core index']
  #allocation1 [shape = 'u32[144,128]{1,0:T(1,128)}', space=vmem, size = 0x12000, scoped, tag = 'internal scratch']
  %s0 = inlined_call_operand.hbm [shape: bf16[8,784], index: 0, kind: input, shape index: {}]
  %s1 = inlined_call_operand.hbm [shape: bf16[784,512], index: 1, kind: input, shape index: {}]
  %s2 = inlined_call_operand.vmem [shape: f32[1,512], index: 2, kind: input, shape index: {}]
  %s3 = inlined_call_operand.hbm [shape: bf16[512,128], index: 3, kind: input, shape index: {}]
  %s4 = inlined_call_operand.vmem [shape: f32[1,128], index: 4, kind: input, shape index: {}]
  %s5 = inlined_call_operand.hbm [shape: f32[8,128], index: 5, kind: output, shape index: {}]
  %s6 = sld [smem:[#allocation0]]
  $region42: #{tpu_custom_call.1} parent=0
    _
  %s8 = ssub.s32 1, %s6
  %s9 = scalar_select 0, %s8, %s6
  $region1: #{tpu_custom_call.1} parent=0
    #allocation2 [shape = 'u8[14336]{0}', space=vmem, size = 0x3800, scoped, tag = 'input window, operand 0, single buffered']
    #allocation3 [shape = 's32[1]{0}', space=sflag, size = 0x4, scoped, tag = 'scoped memory for tpu_custom_call.1']
    #allocation4 [shape = 's32[1]{0}', space=sflag, size = 0x4, scoped, tag = 'scoped memory for tpu_custom_call.1']
    #allocation5 [shape = 'u8[802816]{0}', space=vmem, size = 0xc4000, scoped, tag = 'input window, operand 1, single buffered']
    #allocation6 [shape = 's32[1]{0}', space=sflag, size = 0x4, scoped, tag = 'scoped memory for tpu_custom_call.1']
    #allocation7 [shape = 'u8[131072]{0}', space=vmem, size = 0x20000, scoped, tag = 'input window, operand 3, single buffered']
    #allocation8 [shape = 'u8[4096]{0}', space=vmem, size = 0x1000, scoped, tag = 'output window, operand 0, single buffered']
    %10 = vsyncpa [#allocation3], 0
    %11 = vsyncpa [#allocation6], 0
    %12 = vsyncpa [#allocation4], 0
    // Predicated region
    $region2: #{tpu_custom_call.1} parent=1 // pred_check
      _
    $region3: #{tpu_custom_call.1} parent=1 // pred_check_branch
      %14 = sbr.rel (0) target = $region5
    $region4: #{tpu_custom_call.1} parent=1 // pred_region
      %s16 = ssub.s32 448, 448
      %17 = vsyncadd [#allocation3], %s16
      %s19 = sshll.u32 [#allocation2], 4
      %s20 = int_to_ptr.vmem [resolvable:$true] %s19
      %22 = dma.hbm_to_vmem [thread:$0]  %s0, 448, %s20, [#allocation3]
    $region5: #{tpu_custom_call.1} parent=1 // pred_fallthru
      _
    // Predicated region
    $region6: #{tpu_custom_call.1} parent=1 // pred_check
      _
    $region7: #{tpu_custom_call.1} parent=1 // pred_check_branch
      %24 = sbr.rel (0) target = $region9
    $region8: #{tpu_custom_call.1} parent=1 // pred_region
      %s26 = ssub.s32 25088, 25088
      %27 = vsyncadd [#allocation6], %s26
      %s28 = sshll.u32 [#allocation5], 4
      %s29 = int_to_ptr.vmem [resolvable:$true] %s28
      %34 = dma.hbm_to_vmem [thread:$0]  %s1, 25088, %s29, [#allocation6], 256, 256, 16
    $region9: #{tpu_custom_call.1} parent=1 // pred_fallthru
      _
    // Predicated region
    $region10: #{tpu_custom_call.1} parent=1 // pred_check
      _
    $region11: #{tpu_custom_call.1} parent=1 // pred_check_branch
      %36 = sbr.rel (0) target = $region13
    $region12: #{tpu_custom_call.1} parent=1 // pred_region
      _
    $region13: #{tpu_custom_call.1} parent=1 // pred_fallthru
      _
    // Predicated region
    $region14: #{tpu_custom_call.1} parent=1 // pred_check
      _
    $region15: #{tpu_custom_call.1} parent=1 // pred_check_branch
      %38 = sbr.rel (0) target = $region17
    $region16: #{tpu_custom_call.1} parent=1 // pred_region
      %s40 = ssub.s32 4096, 4096
      %41 = vsyncadd [#allocation6], %s40
      %s42 = sshll.u32 [#allocation7], 4
      %s43 = int_to_ptr.vmem [resolvable:$true] %s42
      %48 = dma.hbm_to_vmem [thread:$0]  %s3, 4096, %s43, [#allocation6], 64, 64, 4
    $region17: #{tpu_custom_call.1} parent=1 // pred_fallthru
      _
    // Predicated region
    $region18: #{tpu_custom_call.1} parent=1 // pred_check
      _
    $region19: #{tpu_custom_call.1} parent=1 // pred_check_branch
      %50 = sbr.rel (0) target = $region21
    $region20: #{tpu_custom_call.1} parent=1 // pred_region
      _
    $region21: #{tpu_custom_call.1} parent=1 // pred_fallthru
      _
    // Predicated region
    $region22: #{tpu_custom_call.1} parent=1 // pred_check
      _
    $region23: #{tpu_custom_call.1} parent=1 // pred_check_branch
      %52 = sbr.rel (0) target = $region25
    $region24: #{tpu_custom_call.1} parent=1 // pred_region
      %53 = dma.done [#allocation3], 448
    $region25: #{tpu_custom_call.1} parent=1 // pred_fallthru
      _
    // Predicated region
    $region26: #{tpu_custom_call.1} parent=1 // pred_check
      _
    $region27: #{tpu_custom_call.1} parent=1 // pred_check_branch
      %55 = sbr.rel (0) target = $region29
    $region28: #{tpu_custom_call.1} parent=1 // pred_region
      %56 = dma.done [#allocation6], 25088
    $region29: #{tpu_custom_call.1} parent=1 // pred_fallthru
      _
    // Predicated region
    $region30: #{tpu_custom_call.1} parent=1 // pred_check
      _
    $region31: #{tpu_custom_call.1} parent=1 // pred_check_branch
      %58 = sbr.rel (0) target = $region33
    $region32: #{tpu_custom_call.1} parent=1 // pred_region
      %59 = dma.done [#allocation6], 4096
    $region33: #{tpu_custom_call.1} parent=1 // pred_fallthru
      _
    %v61 = vld [vmem:[#allocation2] sm:$0xff]
    %v62 = vld [vmem:[#allocation2 + $0x8] sm:$0xff]
    %v63 = vld [vmem:[#allocation2 + $0x10] sm:$0xff]
    %v64 = vld [vmem:[#allocation2 + $0x18] sm:$0xf]
    %v65 = vld [vmem:[#allocation5] sm:$0xff]
    %v66 = vld [vmem:[#allocation5 + $0x8] sm:$0xff]
    %v67 = vld [vmem:[#allocation5 + $0x10] sm:$0xff]
    %v68 = vld [vmem:[#allocation5 + $0x18] sm:$0xff]
    %v69 = vld [vmem:[#allocation5 + $0x20] sm:$0xff]
    %v70 = vld [vmem:[#allocation5 + $0x28] sm:$0xff]
    %v71 = vld [vmem:[#allocation5 + $0x30] sm:$0xff]
    %v72 = vld [vmem:[#allocation5 + $0x38] sm:$0xff]
    %v73 = vld [vmem:[#allocation5 + $0x40] sm:$0xff]
    %v74 = vld [vmem:[#allocation5 + $0x48] sm:$0xff]
    %v75 = vld [vmem:[#allocation5 + $0x50] sm:$0xff]
    %v76 = vld [vmem:[#allocation5 + $0x58] sm:$0xff]
    %v77 = vld [vmem:[#allocation5 + $0x60] sm:$0xff]
    %v78 = vld [vmem:[#allocation5 + $0x68] sm:$0xff]
    %v79 = vld [vmem:[#allocation5 + $0x70] sm:$0xff]
    %v80 = vld [vmem:[#allocation5 + $0x78] sm:$0xff]
    %v81 = vld [vmem:[#allocation5 + $0x80] sm:$0xff]
    %v82 = vld [vmem:[#allocation5 + $0x88] sm:$0xff]
    %v83 = vld [vmem:[#allocation5 + $0x90] sm:$0xff]
    %v84 = vld [vmem:[#allocation5 + $0x98] sm:$0xff]
    %v85 = vld [vmem:[#allocation5 + $0xa0] sm:$0xff]
    %v86 = vld [vmem:[#allocation5 + $0xa8] sm:$0xff]
    %v87 = vld [vmem:[#allocation5 + $0xb0] sm:$0xff]
    %v88 = vld [vmem:[#allocation5 + $0xb8] sm:$0xff]
    %v89 = vld [vmem:[#allocation5 + $0xc0] sm:$0xff]
    %v90 = vld [vmem:[#allocation5 + $0xc8] sm:$0xff]
    %v91 = vld [vmem:[#allocation5 + $0xd0] sm:$0xff]
    %v92 = vld [vmem:[#allocation5 + $0xd8] sm:$0xff]
    %v93 = vld [vmem:[#allocation5 + $0xe0] sm:$0xff]
    %v94 = vld [vmem:[#allocation5 + $0xe8] sm:$0xff]
    %v95 = vld [vmem:[#allocation5 + $0xf0] sm:$0xff]
    %v96 = vld [vmem:[#allocation5 + $0xf8] sm:$0xff]
    %v97 = vld [vmem:[#allocation5 + $0x100] sm:$0xff]
    %v98 = vld [vmem:[#allocation5 + $0x108] sm:$0xff]
    %v99 = vld [vmem:[#allocation5 + $0x110] sm:$0xff]
    %v100 = vld [vmem:[#allocation5 + $0x118] sm:$0xff]
    %v101 = vld [vmem:[#allocation5 + $0x120] sm:$0xff]
    %v102 = vld [vmem:[#allocation5 + $0x128] sm:$0xff]
    %v103 = vld [vmem:[#allocation5 + $0x130] sm:$0xff]
    %v104 = vld [vmem:[#allocation5 + $0x138] sm:$0xff]
    %v105 = vld [vmem:[#allocation5 + $0x140] sm:$0xff]
    %v106 = vld [vmem:[#allocation5 + $0x148] sm:$0xff]
    %v107 = vld [vmem:[#allocation5 + $0x150] sm:$0xff]
    %v108 = vld [vmem:[#allocation5 + $0x158] sm:$0xff]
    %v109 = vld [vmem:[#allocation5 + $0x160] sm:$0xff]
    %v110 = vld [vmem:[#allocation5 + $0x168] sm:$0xff]
    %v111 = vld [vmem:[#allocation5 + $0x170] sm:$0xff]
    %v112 = vld [vmem:[#allocation5 + $0x178] sm:$0xff]
    %v113 = vld [vmem:[#allocation5 + $0x180] sm:$0xff]
    %v114 = vld [vmem:[#allocation5 + $0x188] sm:$0xff]
    %v115 = vld [vmem:[#allocation5 + $0x190] sm:$0xff]
    %v116 = vld [vmem:[#allocation5 + $0x198] sm:$0xff]
    %v117 = vld [vmem:[#allocation5 + $0x1a0] sm:$0xff]
    %v118 = vld [vmem:[#allocation5 + $0x1a8] sm:$0xff]
    %v119 = vld [vmem:[#allocation5 + $0x1b0] sm:$0xff]
    %v120 = vld [vmem:[#allocation5 + $0x1b8] sm:$0xff]
    %v121 = vld [vmem:[#allocation5 + $0x1c0] sm:$0xff]
    %v122 = vld [vmem:[#allocation5 + $0x1c8] sm:$0xff]
    %v123 = vld [vmem:[#allocation5 + $0x1d0] sm:$0xff]
    %v124 = vld [vmem:[#allocation5 + $0x1d8] sm:$0xff]
    %v125 = vld [vmem:[#allocation5 + $0x1e0] sm:$0xff]
    %v126 = vld [vmem:[#allocation5 + $0x1e8] sm:$0xff]
    %v127 = vld [vmem:[#allocation5 + $0x1f0] sm:$0xff]
    %v128 = vld [vmem:[#allocation5 + $0x1f8] sm:$0xff]
    %v129 = vld [vmem:[#allocation5 + $0x200] sm:$0xff]
    %v130 = vld [vmem:[#allocation5 + $0x208] sm:$0xff]
    %v131 = vld [vmem:[#allocation5 + $0x210] sm:$0xff]
    %v132 = vld [vmem:[#allocation5 + $0x218] sm:$0xff]
    %v133 = vld [vmem:[#allocation5 + $0x220] sm:$0xff]
    %v134 = vld [vmem:[#allocation5 + $0x228] sm:$0xff]
    %v135 = vld [vmem:[#allocation5 + $0x230] sm:$0xff]
    %v136 = vld [vmem:[#allocation5 + $0x238] sm:$0xff]
    %v137 = vld [vmem:[#allocation5 + $0x240] sm:$0xff]
    %v138 = vld [vmem:[#allocation5 + $0x248] sm:$0xff]
    %v139 = vld [vmem:[#allocation5 + $0x250] sm:$0xff]
    %v140 = vld [vmem:[#allocation5 + $0x258] sm:$0xff]
    %v141 = vld [vmem:[#allocation5 + $0x260] sm:$0xff]
    %v142 = vld [vmem:[#allocation5 + $0x268] sm:$0xff]
    %v143 = vld [vmem:[#allocation5 + $0x270] sm:$0xff]
    %v144 = vld [vmem:[#allocation5 + $0x278] sm:$0xff]
    %v145 = vld [vmem:[#allocation5 + $0x280] sm:$0xff]
    %v146 = vld [vmem:[#allocation5 + $0x288] sm:$0xff]
    %v147 = vld [vmem:[#allocation5 + $0x290] sm:$0xff]
    %v148 = vld [vmem:[#allocation5 + $0x298] sm:$0xff]
    %v149 = vld [vmem:[#allocation5 + $0x2a0] sm:$0xff]
    %v150 = vld [vmem:[#allocation5 + $0x2a8] sm:$0xff]
    %v151 = vld [vmem:[#allocation5 + $0x2b0] sm:$0xff]
    %v152 = vld [vmem:[#allocation5 + $0x2b8] sm:$0xff]
    %v153 = vld [vmem:[#allocation5 + $0x2c0] sm:$0xff]
    %v154 = vld [vmem:[#allocation5 + $0x2c8] sm:$0xff]
    %v155 = vld [vmem:[#allocation5 + $0x2d0] sm:$0xff]
    %v156 = vld [vmem:[#allocation5 + $0x2d8] sm:$0xff]
    %v157 = vld [vmem:[#allocation5 + $0x2e0] sm:$0xff]
    %v158 = vld [vmem:[#allocation5 + $0x2e8] sm:$0xff]
    %v159 = vld [vmem:[#allocation5 + $0x2f0] sm:$0xff]
    %v160 = vld [vmem:[#allocation5 + $0x2f8] sm:$0xff]
    %v161 = vld [vmem:[#allocation5 + $0x300] sm:$0xff]
    %v162 = vld [vmem:[#allocation5 + $0x308] sm:$0xff]
    %v163 = vld [vmem:[#allocation5 + $0x310] sm:$0xff]
    %v164 = vld [vmem:[#allocation5 + $0x318] sm:$0xff]
    %v165 = vld [vmem:[#allocation5 + $0x320] sm:$0xff]
    %v166 = vld [vmem:[#allocation5 + $0x328] sm:$0xff]
    %v167 = vld [vmem:[#allocation5 + $0x330] sm:$0xff]
    %v168 = vld [vmem:[#allocation5 + $0x338] sm:$0xff]
    %v169 = vld [vmem:[#allocation5 + $0x340] sm:$0xff]
    %v170 = vld [vmem:[#allocation5 + $0x348] sm:$0xff]
    %v171 = vld [vmem:[#allocation5 + $0x350] sm:$0xff]
    %v172 = vld [vmem:[#allocation5 + $0x358] sm:$0xff]
    %v173 = vld [vmem:[#allocation5 + $0x360] sm:$0xff]
    %v174 = vld [vmem:[#allocation5 + $0x368] sm:$0xff]
    %v175 = vld [vmem:[#allocation5 + $0x370] sm:$0xff]
    %v176 = vld [vmem:[#allocation5 + $0x378] sm:$0xff]
    %v177 = vld [vmem:[#allocation5 + $0x380] sm:$0xff]
    %v178 = vld [vmem:[#allocation5 + $0x388] sm:$0xff]
    %v179 = vld [vmem:[#allocation5 + $0x390] sm:$0xff]
    %v180 = vld [vmem:[#allocation5 + $0x398] sm:$0xff]
    %v181 = vld [vmem:[#allocation5 + $0x3a0] sm:$0xff]
    %v182 = vld [vmem:[#allocation5 + $0x3a8] sm:$0xff]
    %v183 = vld [vmem:[#allocation5 + $0x3b0] sm:$0xff]
    %v184 = vld [vmem:[#allocation5 + $0x3b8] sm:$0xff]
    %v185 = vld [vmem:[#allocation5 + $0x3c0] sm:$0xff]
    %v186 = vld [vmem:[#allocation5 + $0x3c8] sm:$0xff]
    %v187 = vld [vmem:[#allocation5 + $0x3d0] sm:$0xff]
    %v188 = vld [vmem:[#allocation5 + $0x3d8] sm:$0xff]
    %v189 = vld [vmem:[#allocation5 + $0x3e0] sm:$0xff]
    %v190 = vld [vmem:[#allocation5 + $0x3e8] sm:$0xff]
    %v191 = vld [vmem:[#allocation5 + $0x3f0] sm:$0xff]
    %v192 = vld [vmem:[#allocation5 + $0x3f8] sm:$0xff]
    %v193 = vld [vmem:[#allocation5 + $0x400] sm:$0xff]
    %v194 = vld [vmem:[#allocation5 + $0x408] sm:$0xff]
    %v195 = vld [vmem:[#allocation5 + $0x410] sm:$0xff]
    %v196 = vld [vmem:[#allocation5 + $0x418] sm:$0xff]
    %v197 = vld [vmem:[#allocation5 + $0x420] sm:$0xff]
    %v198 = vld [vmem:[#allocation5 + $0x428] sm:$0xff]
    %v199 = vld [vmem:[#allocation5 + $0x430] sm:$0xff]
    %v200 = vld [vmem:[#allocation5 + $0x438] sm:$0xff]
    %v201 = vld [vmem:[#allocation5 + $0x440] sm:$0xff]
    %v202 = vld [vmem:[#allocation5 + $0x448] sm:$0xff]
    %v203 = vld [vmem:[#allocation5 + $0x450] sm:$0xff]
    %v204 = vld [vmem:[#allocation5 + $0x458] sm:$0xff]
    %v205 = vld [vmem:[#allocation5 + $0x460] sm:$0xff]
    %v206 = vld [vmem:[#allocation5 + $0x468] sm:$0xff]
    %v207 = vld [vmem:[#allocation5 + $0x470] sm:$0xff]
    %v208 = vld [vmem:[#allocation5 + $0x478] sm:$0xff]
    %v209 = vld [vmem:[#allocation5 + $0x480] sm:$0xff]
    %v210 = vld [vmem:[#allocation5 + $0x488] sm:$0xff]
    %v211 = vld [vmem:[#allocation5 + $0x490] sm:$0xff]
    %v212 = vld [vmem:[#allocation5 + $0x498] sm:$0xff]
    %v213 = vld [vmem:[#allocation5 + $0x4a0] sm:$0xff]
    %v214 = vld [vmem:[#allocation5 + $0x4a8] sm:$0xff]
    %v215 = vld [vmem:[#allocation5 + $0x4b0] sm:$0xff]
    %v216 = vld [vmem:[#allocation5 + $0x4b8] sm:$0xff]
    %v217 = vld [vmem:[#allocation5 + $0x4c0] sm:$0xff]
    %v218 = vld [vmem:[#allocation5 + $0x4c8] sm:$0xff]
    %v219 = vld [vmem:[#allocation5 + $0x4d0] sm:$0xff]
    %v220 = vld [vmem:[#allocation5 + $0x4d8] sm:$0xff]
    %v221 = vld [vmem:[#allocation5 + $0x4e0] sm:$0xff]
    %v222 = vld [vmem:[#allocation5 + $0x4e8] sm:$0xff]
    %v223 = vld [vmem:[#allocation5 + $0x4f0] sm:$0xff]
    %v224 = vld [vmem:[#allocation5 + $0x4f8] sm:$0xff]
    %v225 = vld [vmem:[#allocation5 + $0x500] sm:$0xff]
    %v226 = vld [vmem:[#allocation5 + $0x508] sm:$0xff]
    %v227 = vld [vmem:[#allocation5 + $0x510] sm:$0xff]
    %v228 = vld [vmem:[#allocation5 + $0x518] sm:$0xff]
    %v229 = vld [vmem:[#allocation5 + $0x520] sm:$0xff]
    %v230 = vld [vmem:[#allocation5 + $0x528] sm:$0xff]
    %v231 = vld [vmem:[#allocation5 + $0x530] sm:$0xff]
    %v232 = vld [vmem:[#allocation5 + $0x538] sm:$0xff]
    %v233 = vld [vmem:[#allocation5 + $0x540] sm:$0xff]
    %v234 = vld [vmem:[#allocation5 + $0x548] sm:$0xff]
    %v235 = vld [vmem:[#allocation5 + $0x550] sm:$0xff]
    %v236 = vld [vmem:[#allocation5 + $0x558] sm:$0xff]
    %v237 = vld [vmem:[#allocation5 + $0x560] sm:$0xff]
    %v238 = vld [vmem:[#allocation5 + $0x568] sm:$0xff]
    %v239 = vld [vmem:[#allocation5 + $0x570] sm:$0xff]
    %v240 = vld [vmem:[#allocation5 + $0x578] sm:$0xff]
    %v241 = vld [vmem:[#allocation5 + $0x580] sm:$0xff]
    %v242 = vld [vmem:[#allocation5 + $0x588] sm:$0xff]
    %v243 = vld [vmem:[#allocation5 + $0x590] sm:$0xff]
    %v244 = vld [vmem:[#allocation5 + $0x598] sm:$0xff]
    %v245 = vld [vmem:[#allocation5 + $0x5a0] sm:$0xff]
    %v246 = vld [vmem:[#allocation5 + $0x5a8] sm:$0xff]
    %v247 = vld [vmem:[#allocation5 + $0x5b0] sm:$0xff]
    %v248 = vld [vmem:[#allocation5 + $0x5b8] sm:$0xff]
    %v249 = vld [vmem:[#allocation5 + $0x5c0] sm:$0xff]
    %v250 = vld [vmem:[#allocation5 + $0x5c8] sm:$0xff]
    %v251 = vld [vmem:[#allocation5 + $0x5d0] sm:$0xff]
    %v252 = vld [vmem:[#allocation5 + $0x5d8] sm:$0xff]
    %v253 = vld [vmem:[#allocation5 + $0x5e0] sm:$0xff]
    %v254 = vld [vmem:[#allocation5 + $0x5e8] sm:$0xff]
    %v255 = vld [vmem:[#allocation5 + $0x5f0] sm:$0xff]
    %v256 = vld [vmem:[#allocation5 + $0x5f8] sm:$0xff]
    %v257 = vld [vmem:[#allocation5 + $0x600] sm:$0xff]
    %v258 = vld [vmem:[#allocation5 + $0x608] sm:$0xff]
    %v259 = vld [vmem:[#allocation5 + $0x610] sm:$0xff]
    %v260 = vld [vmem:[#allocation5 + $0x618] sm:$0xff]
    %v261 = vld [vmem:[%s2] sm:$0xf]
    %v263 = vlaneseq
    %v264 = vshrl.u32 %v263, 7
    %v265 = vsub.s32 0, %v264
    %v266 = vrot.slane %v261, %v265
    %v267 = vlaneseq
    %v268 = vshrl.u32 %v267, 7
    %v269 = vsub.s32 1, %v268
    %v270 = vrot.slane %v261, %v269
    %v271 = vlaneseq
    %v272 = vshrl.u32 %v271, 7
    %v273 = vsub.s32 2, %v272
    %v274 = vrot.slane %v261, %v273
    %v275 = vlaneseq
    %v276 = vshrl.u32 %v275, 7
    %v277 = vsub.s32 3, %v276
    %v278 = vrot.slane %v261, %v277
    %v287 = vunpack.c.l.b16 %v61
    %v288 = vunpack.c.h.b16 %v61
    %v289 = vunpack.c.l.b16 %v62
    %v290 = vunpack.c.h.b16 %v62
    %v291 = vunpack.c.l.b16 %v63
    %v292 = vunpack.c.h.b16 %v63
    %v293 = vunpack.c.l.b16 %v64
    %v294 = vpack.c.b16 %v287, %v287
    %v295 = vpack.c.b16 %v288, %v288
    %v296 = vpack.c.b16 %v289, %v289
    %v297 = vpack.c.b16 %v290, %v290
    %v298 = vpack.c.b16 %v291, %v291
    %v299 = vpack.c.b16 %v292, %v292
    %v300 = vpack.c.b16 %v293, %v293
    %v503 = vunpack.c.l.b16 %v65
    %v504 = vunpack.c.h.b16 %v65
    %v505 = vunpack.c.l.b16 %v66
    %v506 = vunpack.c.h.b16 %v66
    %v507 = vunpack.c.l.b16 %v67
    %v508 = vunpack.c.h.b16 %v67
    %v509 = vunpack.c.l.b16 %v68
    %v510 = vunpack.c.h.b16 %v68
    %v511 = vunpack.c.l.b16 %v69
    %v512 = vunpack.c.h.b16 %v69
    %v513 = vunpack.c.l.b16 %v70
    %v514 = vunpack.c.h.b16 %v70
    %v515 = vunpack.c.l.b16 %v71
    %v516 = vunpack.c.h.b16 %v71
    %v517 = vunpack.c.l.b16 %v72
    %v518 = vunpack.c.h.b16 %v72
    %v519 = vunpack.c.l.b16 %v73
    %v520 = vunpack.c.h.b16 %v73
    %v521 = vunpack.c.l.b16 %v74
    %v522 = vunpack.c.h.b16 %v74
    %v523 = vunpack.c.l.b16 %v75
    %v524 = vunpack.c.h.b16 %v75
    %v525 = vunpack.c.l.b16 %v76
    %v526 = vunpack.c.h.b16 %v76
    %v527 = vunpack.c.l.b16 %v77
    %v528 = vunpack.c.h.b16 %v77
    %v529 = vunpack.c.l.b16 %v78
    %v530 = vunpack.c.h.b16 %v78
    %v531 = vunpack.c.l.b16 %v79
    %v532 = vunpack.c.h.b16 %v79
    %v533 = vunpack.c.l.b16 %v80
    %v534 = vunpack.c.h.b16 %v80
    %v535 = vunpack.c.l.b16 %v81
    %v536 = vunpack.c.h.b16 %v81
    %v537 = vunpack.c.l.b16 %v82
    %v538 = vunpack.c.h.b16 %v82
    %v539 = vunpack.c.l.b16 %v83
    %v540 = vunpack.c.h.b16 %v83
    %v541 = vunpack.c.l.b16 %v84
    %v542 = vunpack.c.h.b16 %v84
    %v543 = vunpack.c.l.b16 %v85
    %v544 = vunpack.c.h.b16 %v85
    %v545 = vunpack.c.l.b16 %v86
    %v546 = vunpack.c.h.b16 %v86
    %v547 = vunpack.c.l.b16 %v87
    %v548 = vunpack.c.h.b16 %v87
    %v549 = vunpack.c.l.b16 %v88
    %v550 = vunpack.c.h.b16 %v88
    %v551 = vunpack.c.l.b16 %v89
    %v552 = vunpack.c.h.b16 %v89
    %v553 = vunpack.c.l.b16 %v90
    %v554 = vunpack.c.h.b16 %v90
    %v555 = vunpack.c.l.b16 %v91
    %v556 = vunpack.c.h.b16 %v91
    %v557 = vunpack.c.l.b16 %v92
    %v558 = vunpack.c.h.b16 %v92
    %v559 = vunpack.c.l.b16 %v93
    %v560 = vunpack.c.h.b16 %v93
    %v561 = vunpack.c.l.b16 %v94
    %v562 = vunpack.c.h.b16 %v94
    %v563 = vunpack.c.l.b16 %v95
    %v564 = vunpack.c.h.b16 %v95
    %v565 = vunpack.c.l.b16 %v96
    %v566 = vunpack.c.h.b16 %v96
    %v567 = vunpack.c.l.b16 %v97
    %v568 = vunpack.c.h.b16 %v97
    %v569 = vunpack.c.l.b16 %v98
    %v570 = vunpack.c.h.b16 %v98
    %v571 = vunpack.c.l.b16 %v99
    %v572 = vunpack.c.h.b16 %v99
    %v573 = vunpack.c.l.b16 %v100
    %v574 = vunpack.c.h.b16 %v100
    %v575 = vunpack.c.l.b16 %v101
    %v576 = vunpack.c.h.b16 %v101
    %v577 = vunpack.c.l.b16 %v102
    %v578 = vunpack.c.h.b16 %v102
    %v579 = vunpack.c.l.b16 %v103
    %v580 = vunpack.c.h.b16 %v103
    %v581 = vunpack.c.l.b16 %v104
    %v582 = vunpack.c.h.b16 %v104
    %v583 = vunpack.c.l.b16 %v105
    %v584 = vunpack.c.h.b16 %v105
    %v585 = vunpack.c.l.b16 %v106
    %v586 = vunpack.c.h.b16 %v106
    %v587 = vunpack.c.l.b16 %v107
    %v588 = vunpack.c.h.b16 %v107
    %v589 = vunpack.c.l.b16 %v108
    %v590 = vunpack.c.h.b16 %v108
    %v591 = vunpack.c.l.b16 %v109
    %v592 = vunpack.c.h.b16 %v109
    %v593 = vunpack.c.l.b16 %v110
    %v594 = vunpack.c.h.b16 %v110
    %v595 = vunpack.c.l.b16 %v111
    %v596 = vunpack.c.h.b16 %v111
    %v597 = vunpack.c.l.b16 %v112
    %v598 = vunpack.c.h.b16 %v112
    %v599 = vunpack.c.l.b16 %v113
    %v600 = vunpack.c.h.b16 %v113
    %v601 = vunpack.c.l.b16 %v114
    %v602 = vunpack.c.h.b16 %v114
    %v603 = vunpack.c.l.b16 %v115
    %v604 = vunpack.c.h.b16 %v115
    %v605 = vunpack.c.l.b16 %v116
    %v606 = vunpack.c.h.b16 %v116
    %v607 = vunpack.c.l.b16 %v117
    %v608 = vunpack.c.h.b16 %v117
    %v609 = vunpack.c.l.b16 %v118
    %v610 = vunpack.c.h.b16 %v118
    %v611 = vunpack.c.l.b16 %v119
    %v612 = vunpack.c.h.b16 %v119
    %v613 = vunpack.c.l.b16 %v120
    %v614 = vunpack.c.h.b16 %v120
    %v615 = vunpack.c.l.b16 %v121
    %v616 = vunpack.c.h.b16 %v121
    %v617 = vunpack.c.l.b16 %v122
    %v618 = vunpack.c.h.b16 %v122
    %v619 = vunpack.c.l.b16 %v123
    %v620 = vunpack.c.h.b16 %v123
    %v621 = vunpack.c.l.b16 %v124
    %v622 = vunpack.c.h.b16 %v124
    %v623 = vunpack.c.l.b16 %v125
    %v624 = vunpack.c.h.b16 %v125
    %v625 = vunpack.c.l.b16 %v126
    %v626 = vunpack.c.h.b16 %v126
    %v627 = vunpack.c.l.b16 %v127
    %v628 = vunpack.c.h.b16 %v127
    %v629 = vunpack.c.l.b16 %v128
    %v630 = vunpack.c.h.b16 %v128
    %v631 = vunpack.c.l.b16 %v129
    %v632 = vunpack.c.h.b16 %v129
    %v633 = vunpack.c.l.b16 %v130
    %v634 = vunpack.c.h.b16 %v130
    %v635 = vunpack.c.l.b16 %v131
    %v636 = vunpack.c.h.b16 %v131
    %v637 = vunpack.c.l.b16 %v132
    %v638 = vunpack.c.h.b16 %v132
    %v639 = vunpack.c.l.b16 %v133
    %v640 = vunpack.c.h.b16 %v133
    %v641 = vunpack.c.l.b16 %v134
    %v642 = vunpack.c.h.b16 %v134
    %v643 = vunpack.c.l.b16 %v135
    %v644 = vunpack.c.h.b16 %v135
    %v645 = vunpack.c.l.b16 %v136
    %v646 = vunpack.c.h.b16 %v136
    %v647 = vunpack.c.l.b16 %v137
    %v648 = vunpack.c.h.b16 %v137
    %v649 = vunpack.c.l.b16 %v138
    %v650 = vunpack.c.h.b16 %v138
    %v651 = vunpack.c.l.b16 %v139
    %v652 = vunpack.c.h.b16 %v139
    %v653 = vunpack.c.l.b16 %v140
    %v654 = vunpack.c.h.b16 %v140
    %v655 = vunpack.c.l.b16 %v141
    %v656 = vunpack.c.h.b16 %v141
    %v657 = vunpack.c.l.b16 %v142
    %v658 = vunpack.c.h.b16 %v142
    %v659 = vunpack.c.l.b16 %v143
    %v660 = vunpack.c.h.b16 %v143
    %v661 = vunpack.c.l.b16 %v144
    %v662 = vunpack.c.h.b16 %v144
    %v663 = vunpack.c.l.b16 %v145
    %v664 = vunpack.c.h.b16 %v145
    %v665 = vunpack.c.l.b16 %v146
    %v666 = vunpack.c.h.b16 %v146
    %v667 = vunpack.c.l.b16 %v147
    %v668 = vunpack.c.h.b16 %v147
    %v669 = vunpack.c.l.b16 %v148
    %v670 = vunpack.c.h.b16 %v148
    %v671 = vunpack.c.l.b16 %v149
    %v672 = vunpack.c.h.b16 %v149
    %v673 = vunpack.c.l.b16 %v150
    %v674 = vunpack.c.h.b16 %v150
    %v675 = vunpack.c.l.b16 %v151
    %v676 = vunpack.c.h.b16 %v151
    %v677 = vunpack.c.l.b16 %v152
    %v678 = vunpack.c.h.b16 %v152
    %v679 = vunpack.c.l.b16 %v153
    %v680 = vunpack.c.h.b16 %v153
    %v681 = vunpack.c.l.b16 %v154
    %v682 = vunpack.c.h.b16 %v154
    %v683 = vunpack.c.l.b16 %v155
    %v684 = vunpack.c.h.b16 %v155
    %v685 = vunpack.c.l.b16 %v156
    %v686 = vunpack.c.h.b16 %v156
    %v687 = vunpack.c.l.b16 %v157
    %v688 = vunpack.c.h.b16 %v157
    %v689 = vunpack.c.l.b16 %v158
    %v690 = vunpack.c.h.b16 %v158
    %v691 = vunpack.c.l.b16 %v159
    %v692 = vunpack.c.h.b16 %v159
    %v693 = vunpack.c.l.b16 %v160
    %v694 = vunpack.c.h.b16 %v160
    %v695 = vunpack.c.l.b16 %v161
    %v696 = vunpack.c.h.b16 %v161
    %v697 = vunpack.c.l.b16 %v162
    %v698 = vunpack.c.h.b16 %v162
    %v699 = vunpack.c.l.b16 %v163
    %v700 = vunpack.c.h.b16 %v163
    %v701 = vunpack.c.l.b16 %v164
    %v702 = vunpack.c.h.b16 %v164
    %v703 = vunpack.c.l.b16 %v165
    %v704 = vunpack.c.h.b16 %v165
    %v705 = vunpack.c.l.b16 %v166
    %v706 = vunpack.c.h.b16 %v166
    %v707 = vunpack.c.l.b16 %v167
    %v708 = vunpack.c.h.b16 %v167
    %v709 = vunpack.c.l.b16 %v168
    %v710 = vunpack.c.h.b16 %v168
    %v711 = vunpack.c.l.b16 %v169
    %v712 = vunpack.c.h.b16 %v169
    %v713 = vunpack.c.l.b16 %v170
    %v714 = vunpack.c.h.b16 %v170
    %v715 = vunpack.c.l.b16 %v171
    %v716 = vunpack.c.h.b16 %v171
    %v717 = vunpack.c.l.b16 %v172
    %v718 = vunpack.c.h.b16 %v172
    %v719 = vunpack.c.l.b16 %v173
    %v720 = vunpack.c.h.b16 %v173
    %v721 = vunpack.c.l.b16 %v174
    %v722 = vunpack.c.h.b16 %v174
    %v723 = vunpack.c.l.b16 %v175
    %v724 = vunpack.c.h.b16 %v175
    %v725 = vunpack.c.l.b16 %v176
    %v726 = vunpack.c.h.b16 %v176
    %v727 = vunpack.c.l.b16 %v177
    %v728 = vunpack.c.h.b16 %v177
    %v729 = vunpack.c.l.b16 %v178
    %v730 = vunpack.c.h.b16 %v178
    %v731 = vunpack.c.l.b16 %v179
    %v732 = vunpack.c.h.b16 %v179
    %v733 = vunpack.c.l.b16 %v180
    %v734 = vunpack.c.h.b16 %v180
    %v735 = vunpack.c.l.b16 %v181
    %v736 = vunpack.c.h.b16 %v181
    %v737 = vunpack.c.l.b16 %v182
    %v738 = vunpack.c.h.b16 %v182
    %v739 = vunpack.c.l.b16 %v183
    %v740 = vunpack.c.h.b16 %v183
    %v741 = vunpack.c.l.b16 %v184
    %v742 = vunpack.c.h.b16 %v184
    %v743 = vunpack.c.l.b16 %v185
    %v744 = vunpack.c.h.b16 %v185
    %v745 = vunpack.c.l.b16 %v186
    %v746 = vunpack.c.h.b16 %v186
    %v747 = vunpack.c.l.b16 %v187
    %v748 = vunpack.c.h.b16 %v187
    %v749 = vunpack.c.l.b16 %v188
    %v750 = vunpack.c.h.b16 %v188
    %v751 = vunpack.c.l.b16 %v189
    %v752 = vunpack.c.h.b16 %v189
    %v753 = vunpack.c.l.b16 %v190
    %v754 = vunpack.c.h.b16 %v190
    %v755 = vunpack.c.l.b16 %v191
    %v756 = vunpack.c.h.b16 %v191
    %v757 = vunpack.c.l.b16 %v192
    %v758 = vunpack.c.h.b16 %v192
    %v759 = vunpack.c.l.b16 %v193
    %v760 = vunpack.c.h.b16 %v193
    %v761 = vunpack.c.l.b16 %v194
    %v762 = vunpack.c.h.b16 %v194
    %v763 = vunpack.c.l.b16 %v195
    %v764 = vunpack.c.h.b16 %v195
    %v765 = vunpack.c.l.b16 %v196
    %v766 = vunpack.c.h.b16 %v196
    %v767 = vunpack.c.l.b16 %v197
    %v768 = vunpack.c.h.b16 %v197
    %v769 = vunpack.c.l.b16 %v198
    %v770 = vunpack.c.h.b16 %v198
    %v771 = vunpack.c.l.b16 %v199
    %v772 = vunpack.c.h.b16 %v199
    %v773 = vunpack.c.l.b16 %v200
    %v774 = vunpack.c.h.b16 %v200
    %v775 = vunpack.c.l.b16 %v201
    %v776 = vunpack.c.h.b16 %v201
    %v777 = vunpack.c.l.b16 %v202
    %v778 = vunpack.c.h.b16 %v202
    %v779 = vunpack.c.l.b16 %v203
    %v780 = vunpack.c.h.b16 %v203
    %v781 = vunpack.c.l.b16 %v204
    %v782 = vunpack.c.h.b16 %v204
    %v783 = vunpack.c.l.b16 %v205
    %v784 = vunpack.c.h.b16 %v205
    %v785 = vunpack.c.l.b16 %v206
    %v786 = vunpack.c.h.b16 %v206
    %v787 = vunpack.c.l.b16 %v207
    %v788 = vunpack.c.h.b16 %v207
    %v789 = vunpack.c.l.b16 %v208
    %v790 = vunpack.c.h.b16 %v208
    %v791 = vunpack.c.l.b16 %v209
    %v792 = vunpack.c.h.b16 %v209
    %v793 = vunpack.c.l.b16 %v210
    %v794 = vunpack.c.h.b16 %v210
    %v795 = vunpack.c.l.b16 %v211
    %v796 = vunpack.c.h.b16 %v211
    %v797 = vunpack.c.l.b16 %v212
    %v798 = vunpack.c.h.b16 %v212
    %v799 = vunpack.c.l.b16 %v213
    %v800 = vunpack.c.h.b16 %v213
    %v801 = vunpack.c.l.b16 %v214
    %v802 = vunpack.c.h.b16 %v214
    %v803 = vunpack.c.l.b16 %v215
    %v804 = vunpack.c.h.b16 %v215
    %v805 = vunpack.c.l.b16 %v216
    %v806 = vunpack.c.h.b16 %v216
    %v807 = vunpack.c.l.b16 %v217
    %v808 = vunpack.c.h.b16 %v217
    %v809 = vunpack.c.l.b16 %v218
    %v810 = vunpack.c.h.b16 %v218
    %v811 = vunpack.c.l.b16 %v219
    %v812 = vunpack.c.h.b16 %v219
    %v813 = vunpack.c.l.b16 %v220
    %v814 = vunpack.c.h.b16 %v220
    %v815 = vunpack.c.l.b16 %v221
    %v816 = vunpack.c.h.b16 %v221
    %v817 = vunpack.c.l.b16 %v222
    %v818 = vunpack.c.h.b16 %v222
    %v819 = vunpack.c.l.b16 %v223
    %v820 = vunpack.c.h.b16 %v223
    %v821 = vunpack.c.l.b16 %v224
    %v822 = vunpack.c.h.b16 %v224
    %v823 = vunpack.c.l.b16 %v225
    %v824 = vunpack.c.h.b16 %v225
    %v825 = vunpack.c.l.b16 %v226
    %v826 = vunpack.c.h.b16 %v226
    %v827 = vunpack.c.l.b16 %v227
    %v828 = vunpack.c.h.b16 %v227
    %v829 = vunpack.c.l.b16 %v228
    %v830 = vunpack.c.h.b16 %v228
    %v831 = vunpack.c.l.b16 %v229
    %v832 = vunpack.c.h.b16 %v229
    %v833 = vunpack.c.l.b16 %v230
    %v834 = vunpack.c.h.b16 %v230
    %v835 = vunpack.c.l.b16 %v231
    %v836 = vunpack.c.h.b16 %v231
    %v837 = vunpack.c.l.b16 %v232
    %v838 = vunpack.c.h.b16 %v232
    %v839 = vunpack.c.l.b16 %v233
    %v840 = vunpack.c.h.b16 %v233
    %v841 = vunpack.c.l.b16 %v234
    %v842 = vunpack.c.h.b16 %v234
    %v843 = vunpack.c.l.b16 %v235
    %v844 = vunpack.c.h.b16 %v235
    %v845 = vunpack.c.l.b16 %v236
    %v846 = vunpack.c.h.b16 %v236
    %v847 = vunpack.c.l.b16 %v237
    %v848 = vunpack.c.h.b16 %v237
    %v849 = vunpack.c.l.b16 %v238
    %v850 = vunpack.c.h.b16 %v238
    %v851 = vunpack.c.l.b16 %v239
    %v852 = vunpack.c.h.b16 %v239
    %v853 = vunpack.c.l.b16 %v240
    %v854 = vunpack.c.h.b16 %v240
    %v855 = vunpack.c.l.b16 %v241
    %v856 = vunpack.c.h.b16 %v241
    %v857 = vunpack.c.l.b16 %v242
    %v858 = vunpack.c.h.b16 %v242
    %v859 = vunpack.c.l.b16 %v243
    %v860 = vunpack.c.h.b16 %v243
    %v861 = vunpack.c.l.b16 %v244
    %v862 = vunpack.c.h.b16 %v244
    %v863 = vunpack.c.l.b16 %v245
    %v864 = vunpack.c.h.b16 %v245
    %v865 = vunpack.c.l.b16 %v246
    %v866 = vunpack.c.h.b16 %v246
    %v867 = vunpack.c.l.b16 %v247
    %v868 = vunpack.c.h.b16 %v247
    %v869 = vunpack.c.l.b16 %v248
    %v870 = vunpack.c.h.b16 %v248
    %v871 = vunpack.c.l.b16 %v249
    %v872 = vunpack.c.h.b16 %v249
    %v873 = vunpack.c.l.b16 %v250
    %v874 = vunpack.c.h.b16 %v250
    %v875 = vunpack.c.l.b16 %v251
    %v876 = vunpack.c.h.b16 %v251
    %v877 = vunpack.c.l.b16 %v252
    %v878 = vunpack.c.h.b16 %v252
    %v879 = vunpack.c.l.b16 %v253
    %v880 = vunpack.c.h.b16 %v253
    %v881 = vunpack.c.l.b16 %v254
    %v882 = vunpack.c.h.b16 %v254
    %v883 = vunpack.c.l.b16 %v255
    %v884 = vunpack.c.h.b16 %v255
    %v885 = vunpack.c.l.b16 %v256
    %v886 = vunpack.c.h.b16 %v256
    %v887 = vunpack.c.l.b16 %v257
    %v888 = vunpack.c.h.b16 %v257
    %v889 = vunpack.c.l.b16 %v258
    %v890 = vunpack.c.h.b16 %v258
    %v891 = vunpack.c.l.b16 %v259
    %v892 = vunpack.c.h.b16 %v259
    %v893 = vunpack.c.l.b16 %v260
    %v894 = vunpack.c.h.b16 %v260
    %v895 = vpack.c.b16 %v507, %v503
    %v896 = vpack.c.b16 %v508, %v504
    %v897 = vpack.c.b16 %v509, %v505
    %v898 = vpack.c.b16 %v510, %v506
    %v899 = vpack.c.b16 %v515, %v511
    %v900 = vpack.c.b16 %v516, %v512
    %v901 = vpack.c.b16 %v517, %v513
    %v902 = vpack.c.b16 %v518, %v514
    %v903 = vpack.c.b16 %v523, %v519
    %v904 = vpack.c.b16 %v524, %v520
    %v905 = vpack.c.b16 %v525, %v521
    %v906 = vpack.c.b16 %v526, %v522
    %v907 = vpack.c.b16 %v531, %v527
    %v908 = vpack.c.b16 %v532, %v528
    %v909 = vpack.c.b16 %v533, %v529
    %v910 = vpack.c.b16 %v534, %v530
    %v911 = vpack.c.b16 %v539, %v535
    %v912 = vpack.c.b16 %v540, %v536
    %v913 = vpack.c.b16 %v541, %v537
    %v914 = vpack.c.b16 %v542, %v538
    %v915 = vpack.c.b16 %v547, %v543
    %v916 = vpack.c.b16 %v548, %v544
    %v917 = vpack.c.b16 %v549, %v545
    %v918 = vpack.c.b16 %v550, %v546
    %v919 = vpack.c.b16 %v555, %v551
    %v920 = vpack.c.b16 %v556, %v552
    %v921 = vpack.c.b16 %v557, %v553
    %v922 = vpack.c.b16 %v558, %v554
    %v923 = vpack.c.b16 %v563, %v559
    %v924 = vpack.c.b16 %v564, %v560
    %v925 = vpack.c.b16 %v565, %v561
    %v926 = vpack.c.b16 %v566, %v562
    %v927 = vpack.c.b16 %v571, %v567
    %v928 = vpack.c.b16 %v572, %v568
    %v929 = vpack.c.b16 %v573, %v569
    %v930 = vpack.c.b16 %v574, %v570
    %v931 = vpack.c.b16 %v579, %v575
    %v932 = vpack.c.b16 %v580, %v576
    %v933 = vpack.c.b16 %v581, %v577
    %v934 = vpack.c.b16 %v582, %v578
    %v935 = vpack.c.b16 %v587, %v583
    %v936 = vpack.c.b16 %v588, %v584
    %v937 = vpack.c.b16 %v589, %v585
    %v938 = vpack.c.b16 %v590, %v586
    %v939 = vpack.c.b16 %v595, %v591
    %v940 = vpack.c.b16 %v596, %v592
    %v941 = vpack.c.b16 %v597, %v593
    %v942 = vpack.c.b16 %v598, %v594
    %v943 = vpack.c.b16 %v603, %v599
    %v944 = vpack.c.b16 %v604, %v600
    %v945 = vpack.c.b16 %v605, %v601
    %v946 = vpack.c.b16 %v606, %v602
    %v947 = vpack.c.b16 %v611, %v607
    %v948 = vpack.c.b16 %v612, %v608
    %v949 = vpack.c.b16 %v613, %v609
    %v950 = vpack.c.b16 %v614, %v610
    %v951 = vpack.c.b16 %v619, %v615
    %v952 = vpack.c.b16 %v620, %v616
    %v953 = vpack.c.b16 %v621, %v617
    %v954 = vpack.c.b16 %v622, %v618
    %v955 = vpack.c.b16 %v627, %v623
    %v956 = vpack.c.b16 %v628, %v624
    %v957 = vpack.c.b16 %v629, %v625
    %v958 = vpack.c.b16 %v630, %v626
    %v959 = vpack.c.b16 %v635, %v631
    %v960 = vpack.c.b16 %v636, %v632
    %v961 = vpack.c.b16 %v637, %v633
    %v962 = vpack.c.b16 %v638, %v634
    %v963 = vpack.c.b16 %v643, %v639
    %v964 = vpack.c.b16 %v644, %v640
    %v965 = vpack.c.b16 %v645, %v641
    %v966 = vpack.c.b16 %v646, %v642
    %v967 = vpack.c.b16 %v651, %v647
    %v968 = vpack.c.b16 %v652, %v648
    %v969 = vpack.c.b16 %v653, %v649
    %v970 = vpack.c.b16 %v654, %v650
    %v971 = vpack.c.b16 %v659, %v655
    %v972 = vpack.c.b16 %v660, %v656
    %v973 = vpack.c.b16 %v661, %v657
    %v974 = vpack.c.b16 %v662, %v658
    %v975 = vpack.c.b16 %v667, %v663
    %v976 = vpack.c.b16 %v668, %v664
    %v977 = vpack.c.b16 %v669, %v665
    %v978 = vpack.c.b16 %v670, %v666
    %v979 = vpack.c.b16 %v675, %v671
    %v980 = vpack.c.b16 %v676, %v672
    %v981 = vpack.c.b16 %v677, %v673
    %v982 = vpack.c.b16 %v678, %v674
    %v983 = vpack.c.b16 %v683, %v679
    %v984 = vpack.c.b16 %v684, %v680
    %v985 = vpack.c.b16 %v685, %v681
    %v986 = vpack.c.b16 %v686, %v682
    %v987 = vpack.c.b16 %v691, %v687
    %v988 = vpack.c.b16 %v692, %v688
    %v989 = vpack.c.b16 %v693, %v689
    %v990 = vpack.c.b16 %v694, %v690
    %v991 = vpack.c.b16 %v699, %v695
    %v992 = vpack.c.b16 %v700, %v696
    %v993 = vpack.c.b16 %v701, %v697
    %v994 = vpack.c.b16 %v702, %v698
    %v995 = vpack.c.b16 %v707, %v703
    %v996 = vpack.c.b16 %v708, %v704
    %v997 = vpack.c.b16 %v709, %v705
    %v998 = vpack.c.b16 %v710, %v706
    %v999 = vpack.c.b16 %v715, %v711
    %v1000 = vpack.c.b16 %v716, %v712
    %v1001 = vpack.c.b16 %v717, %v713
    %v1002 = vpack.c.b16 %v718, %v714
    %v1003 = vpack.c.b16 %v723, %v719
    %v1004 = vpack.c.b16 %v724, %v720
    %v1005 = vpack.c.b16 %v725, %v721
    %v1006 = vpack.c.b16 %v726, %v722
    %v1007 = vpack.c.b16 %v731, %v727
    %v1008 = vpack.c.b16 %v732, %v728
    %v1009 = vpack.c.b16 %v733, %v729
    %v1010 = vpack.c.b16 %v734, %v730
    %v1011 = vpack.c.b16 %v739, %v735
    %v1012 = vpack.c.b16 %v740, %v736
    %v1013 = vpack.c.b16 %v741, %v737
    %v1014 = vpack.c.b16 %v742, %v738
    %v1015 = vpack.c.b16 %v747, %v743
    %v1016 = vpack.c.b16 %v748, %v744
    %v1017 = vpack.c.b16 %v749, %v745
    %v1018 = vpack.c.b16 %v750, %v746
    %v1019 = vpack.c.b16 %v755, %v751
    %v1020 = vpack.c.b16 %v756, %v752
    %v1021 = vpack.c.b16 %v757, %v753
    %v1022 = vpack.c.b16 %v758, %v754
    %v1023 = vpack.c.b16 %v763, %v759
    %v1024 = vpack.c.b16 %v764, %v760
    %v1025 = vpack.c.b16 %v765, %v761
    %v1026 = vpack.c.b16 %v766, %v762
    %v1027 = vpack.c.b16 %v771, %v767
    %v1028 = vpack.c.b16 %v772, %v768
    %v1029 = vpack.c.b16 %v773, %v769
    %v1030 = vpack.c.b16 %v774, %v770
    %v1031 = vpack.c.b16 %v779, %v775
    %v1032 = vpack.c.b16 %v780, %v776
    %v1033 = vpack.c.b16 %v781, %v777
    %v1034 = vpack.c.b16 %v782, %v778
    %v1035 = vpack.c.b16 %v787, %v783
    %v1036 = vpack.c.b16 %v788, %v784
    %v1037 = vpack.c.b16 %v789, %v785
    %v1038 = vpack.c.b16 %v790, %v786
    %v1039 = vpack.c.b16 %v795, %v791
    %v1040 = vpack.c.b16 %v796, %v792
    %v1041 = vpack.c.b16 %v797, %v793
    %v1042 = vpack.c.b16 %v798, %v794
    %v1043 = vpack.c.b16 %v803, %v799
    %v1044 = vpack.c.b16 %v804, %v800
    %v1045 = vpack.c.b16 %v805, %v801
    %v1046 = vpack.c.b16 %v806, %v802
    %v1047 = vpack.c.b16 %v811, %v807
    %v1048 = vpack.c.b16 %v812, %v808
    %v1049 = vpack.c.b16 %v813, %v809
    %v1050 = vpack.c.b16 %v814, %v810
    %v1051 = vpack.c.b16 %v819, %v815
    %v1052 = vpack.c.b16 %v820, %v816
    %v1053 = vpack.c.b16 %v821, %v817
    %v1054 = vpack.c.b16 %v822, %v818
    %v1055 = vpack.c.b16 %v827, %v823
    %v1056 = vpack.c.b16 %v828, %v824
    %v1057 = vpack.c.b16 %v829, %v825
    %v1058 = vpack.c.b16 %v830, %v826
    %v1059 = vpack.c.b16 %v835, %v831
    %v1060 = vpack.c.b16 %v836, %v832
    %v1061 = vpack.c.b16 %v837, %v833
    %v1062 = vpack.c.b16 %v838, %v834
    %v1063 = vpack.c.b16 %v843, %v839
    %v1064 = vpack.c.b16 %v844, %v840
    %v1065 = vpack.c.b16 %v845, %v841
    %v1066 = vpack.c.b16 %v846, %v842
    %v1067 = vpack.c.b16 %v851, %v847
    %v1068 = vpack.c.b16 %v852, %v848
    %v1069 = vpack.c.b16 %v853, %v849
    %v1070 = vpack.c.b16 %v854, %v850
    %v1071 = vpack.c.b16 %v859, %v855
    %v1072 = vpack.c.b16 %v860, %v856
    %v1073 = vpack.c.b16 %v861, %v857
    %v1074 = vpack.c.b16 %v862, %v858
    %v1075 = vpack.c.b16 %v867, %v863
    %v1076 = vpack.c.b16 %v868, %v864
    %v1077 = vpack.c.b16 %v869, %v865
    %v1078 = vpack.c.b16 %v870, %v866
    %v1079 = vpack.c.b16 %v875, %v871
    %v1080 = vpack.c.b16 %v876, %v872
    %v1081 = vpack.c.b16 %v877, %v873
    %v1082 = vpack.c.b16 %v878, %v874
    %v1083 = vpack.c.b16 %v883, %v879
    %v1084 = vpack.c.b16 %v884, %v880
    %v1085 = vpack.c.b16 %v885, %v881
    %v1086 = vpack.c.b16 %v886, %v882
    %v1087 = vpack.c.b16 %v891, %v887
    %v1088 = vpack.c.b16 %v892, %v888
    %v1089 = vpack.c.b16 %v893, %v889
    %v1090 = vpack.c.b16 %v894, %v890
    %vm1287 = vcmask 130048
    %v1289 = vsel %vm1287, %v300, 0
    %1291 = vmatprep.subr.bf16.mxu0 %v896
    %1292 = vmatpush1.bf16.msra.mxu0 %v895
    %1293 = vmatprep.subr.bf16.mxu0 %v900
    %1294 = vmatpush1.bf16.msra.mxu0 %v899
    %1295 = vmatprep.subr.bf16.mxu0 %v904
    %1296 = vmatpush1.bf16.msra.mxu0 %v903
    %1297 = vmatprep.subr.bf16.mxu0 %v908
    %1298 = vmatpush1.bf16.msra.mxu0 %v907
    %1299 = vmatprep.subr.bf16.mxu0 %v912
    %1300 = vmatpush1.bf16.msra.mxu0 %v911
    %1301 = vmatprep.subr.bf16.mxu0 %v916
    %1302 = vmatpush1.bf16.msra.mxu0 %v915
    %1303 = vmatprep.subr.bf16.mxu0 %v920
    %1304 = vmatpush1.bf16.msra.mxu0 %v919
    %1305 = vmatprep.subr.bf16.mxu0 %v924
    %1306 = vmatpush1.bf16.msra.mxu0 %v923
    %1307 = vmatprep.subr.bf16.mxu0 %v928
    %1308 = vmatpush1.bf16.msra.mxu0 %v927
    %1309 = vmatprep.subr.bf16.mxu0 %v932
    %1310 = vmatpush1.bf16.msra.mxu0 %v931
    %1311 = vmatprep.subr.bf16.mxu0 %v936
    %1312 = vmatpush1.bf16.msra.mxu0 %v935
    %1313 = vmatprep.subr.bf16.mxu0 %v940
    %1314 = vmatpush1.bf16.msra.mxu0 %v939
    %1315 = vmatprep.subr.bf16.mxu0 %v944
    %1316 = vmatpush1.bf16.msra.mxu0 %v943
    %1317 = vmatprep.subr.bf16.mxu0 %v948
    %1318 = vmatpush1.bf16.msra.mxu0 %v947
    %1319 = vmatprep.subr.bf16.mxu0 %v952
    %1320 = vmatpush1.bf16.msra.mxu0 %v951
    %1321 = vmatprep.subr.bf16.mxu0 %v956
    %1322 = vmatpush1.bf16.msra.mxu0 %v955
    %1323 = vmatprep.mubr.bf16.mxu0 %v295
    %1324 = vmatmul.mubr.bf16.gmra.mrb[0].mxu0 %v294
    %v1325 = vpop.f32.mrb[0].mxu0
    %v1326 = vadd.f32 %v266, %v1325
    %v1327 = vpop.f32.mrb[0].mxu0
    %v1328 = vadd.f32 %v270, %v1327
    %v1329 = vpop.f32.mrb[0].mxu0
    %v1330 = vpop.f32.mrb[0].mxu0
    %1331 = vdwg.mxu0
    %1332 = vmatprep.subr.bf16.mxu0 %v960
    %1333 = vmatpush1.bf16.msra.mxu0 %v959
    %1334 = vmatprep.subr.bf16.mxu0 %v964
    %1335 = vmatpush1.bf16.msra.mxu0 %v963
    %1336 = vmatprep.subr.bf16.mxu0 %v968
    %1337 = vmatpush1.bf16.msra.mxu0 %v967
    %1338 = vmatprep.subr.bf16.mxu0 %v972
    %1339 = vmatpush1.bf16.msra.mxu0 %v971
    %1340 = vmatprep.subr.bf16.mxu0 %v976
    %1341 = vmatpush1.bf16.msra.mxu0 %v975
    %1342 = vmatprep.subr.bf16.mxu0 %v980
    %1343 = vmatpush1.bf16.msra.mxu0 %v979
    %1344 = vmatprep.subr.bf16.mxu0 %v984
    %1345 = vmatpush1.bf16.msra.mxu0 %v983
    %1346 = vmatprep.subr.bf16.mxu0 %v988
    %1347 = vmatpush1.bf16.msra.mxu0 %v987
    %1348 = vmatprep.subr.bf16.mxu0 %v992
    %1349 = vmatpush1.bf16.msra.mxu0 %v991
    %1350 = vmatprep.subr.bf16.mxu0 %v996
    %1351 = vmatpush1.bf16.msra.mxu0 %v995
    %1352 = vmatprep.subr.bf16.mxu0 %v1000
    %1353 = vmatpush1.bf16.msra.mxu0 %v999
    %1354 = vmatprep.subr.bf16.mxu0 %v1004
    %1355 = vmatpush1.bf16.msra.mxu0 %v1003
    %1356 = vmatprep.subr.bf16.mxu0 %v1008
    %1357 = vmatpush1.bf16.msra.mxu0 %v1007
    %1358 = vmatprep.subr.bf16.mxu0 %v1012
    %1359 = vmatpush1.bf16.msra.mxu0 %v1011
    %1360 = vmatprep.subr.bf16.mxu0 %v1016
    %1361 = vmatpush1.bf16.msra.mxu0 %v1015
    %1362 = vmatprep.subr.bf16.mxu0 %v1020
    %1363 = vmatpush1.bf16.msra.mxu0 %v1019
    %1364 = vmatprep.mubr.bf16.mxu0 %v297
    %1365 = vmatmul.mubr.bf16.gmra.mrb[0].mxu0 %v296
    %v1366 = vpop.f32.mrb[0].mxu0
    %v1367 = vadd.f32 %v1326, %v1366
    %v1368 = vpop.f32.mrb[0].mxu0
    %v1369 = vadd.f32 %v1328, %v1368
    %v1370 = vpop.f32.mrb[0].mxu0
    %v1371 = vpop.f32.mrb[0].mxu0
    %1372 = vdwg.mxu0
    %1373 = vmatprep.subr.bf16.mxu0 %v1024
    %1374 = vmatpush1.bf16.msra.mxu0 %v1023
    %1375 = vmatprep.subr.bf16.mxu0 %v1028
    %1376 = vmatpush1.bf16.msra.mxu0 %v1027
    %1377 = vmatprep.subr.bf16.mxu0 %v1032
    %1378 = vmatpush1.bf16.msra.mxu0 %v1031
    %1379 = vmatprep.subr.bf16.mxu0 %v1036
    %1380 = vmatpush1.bf16.msra.mxu0 %v1035
    %1381 = vmatprep.subr.bf16.mxu0 %v1040
    %1382 = vmatpush1.bf16.msra.mxu0 %v1039
    %1383 = vmatprep.subr.bf16.mxu0 %v1044
    %1384 = vmatpush1.bf16.msra.mxu0 %v1043
    %1385 = vmatprep.subr.bf16.mxu0 %v1048
    %1386 = vmatpush1.bf16.msra.mxu0 %v1047
    %1387 = vmatprep.subr.bf16.mxu0 %v1052
    %1388 = vmatpush1.bf16.msra.mxu0 %v1051
    %1389 = vmatprep.subr.bf16.mxu0 %v1056
    %1390 = vmatpush1.bf16.msra.mxu0 %v1055
    %1391 = vmatprep.subr.bf16.mxu0 %v1060
    %1392 = vmatpush1.bf16.msra.mxu0 %v1059
    %1393 = vmatprep.subr.bf16.mxu0 %v1064
    %1394 = vmatpush1.bf16.msra.mxu0 %v1063
    %1395 = vmatprep.subr.bf16.mxu0 %v1068
    %1396 = vmatpush1.bf16.msra.mxu0 %v1067
    %1397 = vmatprep.subr.bf16.mxu0 %v1072
    %1398 = vmatpush1.bf16.msra.mxu0 %v1071
    %1399 = vmatprep.subr.bf16.mxu0 %v1076
    %1400 = vmatpush1.bf16.msra.mxu0 %v1075
    %1401 = vmatprep.subr.bf16.mxu0 %v1080
    %1402 = vmatpush1.bf16.msra.mxu0 %v1079
    %1403 = vmatprep.subr.bf16.mxu0 %v1084
    %1404 = vmatpush1.bf16.msra.mxu0 %v1083
    %1405 = vmatprep.mubr.bf16.mxu0 %v299
    %1406 = vmatmul.mubr.bf16.gmra.mrb[0].mxu0 %v298
    %v1407 = vpop.f32.mrb[0].mxu0
    %v1408 = vadd.f32 %v1367, %v1407
    %v1409 = vpop.f32.mrb[0].mxu0
    %v1410 = vadd.f32 %v1369, %v1409
    %v1411 = vpop.f32.mrb[0].mxu0
    %v1412 = vpop.f32.mrb[0].mxu0
    %1413 = vdwg.mxu0
    %1414 = vmatprep.subr.bf16.mxu0 %v1088
    %1415 = vmatpush1.bf16.msra.mxu0 %v1087
    %1416 = vmatprep.subr.bf16.mxu0 0
    %1417 = vmatpush1.bf16.msra.mxu0 0
    %1418 = vmatprep.subr.bf16.mxu0 0
    %1419 = vmatpush1.bf16.msra.mxu0 0
    %1420 = vmatprep.subr.bf16.mxu0 0
    %1421 = vmatpush1.bf16.msra.mxu0 0
    %1422 = vmatprep.subr.bf16.mxu0 0
    %1423 = vmatpush1.bf16.msra.mxu0 0
    %1424 = vmatprep.subr.bf16.mxu0 0
    %1425 = vmatpush1.bf16.msra.mxu0 0
    %1426 = vmatprep.subr.bf16.mxu0 0
    %1427 = vmatpush1.bf16.msra.mxu0 0
    %1428 = vmatprep.subr.bf16.mxu0 0
    %1429 = vmatpush1.bf16.msra.mxu0 0
    %1430 = vmatprep.subr.bf16.mxu0 0
    %1431 = vmatpush1.bf16.msra.mxu0 0
    %1432 = vmatprep.subr.bf16.mxu0 0
    %1433 = vmatpush1.bf16.msra.mxu0 0
    %1434 = vmatprep.subr.bf16.mxu0 0
    %1435 = vmatpush1.bf16.msra.mxu0 0
    %1436 = vmatprep.subr.bf16.mxu0 0
    %1437 = vmatpush1.bf16.msra.mxu0 0
    %1438 = vmatprep.subr.bf16.mxu0 0
    %1439 = vmatpush1.bf16.msra.mxu0 0
    %1440 = vmatprep.subr.bf16.mxu0 0
    %1441 = vmatpush1.bf16.msra.mxu0 0
    %1442 = vmatprep.subr.bf16.mxu0 0
    %1443 = vmatpush1.bf16.msra.mxu0 0
    %1444 = vmatprep.subr.bf16.mxu0 0
    %1445 = vmatpush1.bf16.msra.mxu0 0
    %1446 = vmatprep.mubr.bf16.mxu0 0
    %1447 = vmatmul.mubr.bf16.gmra.mrb[0].mxu0 %v1289
    %v1448 = vpop.f32.mrb[0].mxu0
    %v1449 = vadd.f32 %v1408, %v1448
    %v1450 = vpop.f32.mrb[0].mxu0
    %v1451 = vadd.f32 %v1410, %v1450
    %v1452 = vpop.f32.mrb[0].mxu0
    %v1453 = vpop.f32.mrb[0].mxu0
    %1454 = vdwg.mxu0
    %1455 = vmatprep.subr.bf16.mxu0 %v898
    %1456 = vmatpush1.bf16.msra.mxu0 %v897
    %1457 = vmatprep.subr.bf16.mxu0 %v902
    %1458 = vmatpush1.bf16.msra.mxu0 %v901
    %1459 = vmatprep.subr.bf16.mxu0 %v906
    %1460 = vmatpush1.bf16.msra.mxu0 %v905
    %1461 = vmatprep.subr.bf16.mxu0 %v910
    %1462 = vmatpush1.bf16.msra.mxu0 %v909
    %1463 = vmatprep.subr.bf16.mxu0 %v914
    %1464 = vmatpush1.bf16.msra.mxu0 %v913
    %1465 = vmatprep.subr.bf16.mxu0 %v918
    %1466 = vmatpush1.bf16.msra.mxu0 %v917
    %1467 = vmatprep.subr.bf16.mxu0 %v922
    %1468 = vmatpush1.bf16.msra.mxu0 %v921
    %1469 = vmatprep.subr.bf16.mxu0 %v926
    %1470 = vmatpush1.bf16.msra.mxu0 %v925
    %1471 = vmatprep.subr.bf16.mxu0 %v930
    %1472 = vmatpush1.bf16.msra.mxu0 %v929
    %1473 = vmatprep.subr.bf16.mxu0 %v934
    %1474 = vmatpush1.bf16.msra.mxu0 %v933
    %1475 = vmatprep.subr.bf16.mxu0 %v938
    %1476 = vmatpush1.bf16.msra.mxu0 %v937
    %1477 = vmatprep.subr.bf16.mxu0 %v942
    %1478 = vmatpush1.bf16.msra.mxu0 %v941
    %1479 = vmatprep.subr.bf16.mxu0 %v946
    %1480 = vmatpush1.bf16.msra.mxu0 %v945
    %1481 = vmatprep.subr.bf16.mxu0 %v950
    %1482 = vmatpush1.bf16.msra.mxu0 %v949
    %1483 = vmatprep.subr.bf16.mxu0 %v954
    %1484 = vmatpush1.bf16.msra.mxu0 %v953
    %1485 = vmatprep.subr.bf16.mxu0 %v958
    %1486 = vmatpush1.bf16.msra.mxu0 %v957
    %1487 = vmatprep.mubr.bf16.mxu0 %v295
    %1488 = vmatmul.mubr.bf16.gmra.mrb[0].mxu0 %v294
    %v1489 = vpop.f32.mrb[0].mxu0
    %v1490 = vadd.f32 %v274, %v1489
    %v1491 = vpop.f32.mrb[0].mxu0
    %v1492 = vadd.f32 %v278, %v1491
    %v1493 = vpop.f32.mrb[0].mxu0
    %v1494 = vpop.f32.mrb[0].mxu0
    %1495 = vdwg.mxu0
    %1496 = vmatprep.subr.bf16.mxu0 %v962
    %1497 = vmatpush1.bf16.msra.mxu0 %v961
    %1498 = vmatprep.subr.bf16.mxu0 %v966
    %1499 = vmatpush1.bf16.msra.mxu0 %v965
    %1500 = vmatprep.subr.bf16.mxu0 %v970
    %1501 = vmatpush1.bf16.msra.mxu0 %v969
    %1502 = vmatprep.subr.bf16.mxu0 %v974
    %1503 = vmatpush1.bf16.msra.mxu0 %v973
    %1504 = vmatprep.subr.bf16.mxu0 %v978
    %1505 = vmatpush1.bf16.msra.mxu0 %v977
    %1506 = vmatprep.subr.bf16.mxu0 %v982
    %1507 = vmatpush1.bf16.msra.mxu0 %v981
    %1508 = vmatprep.subr.bf16.mxu0 %v986
    %1509 = vmatpush1.bf16.msra.mxu0 %v985
    %1510 = vmatprep.subr.bf16.mxu0 %v990
    %1511 = vmatpush1.bf16.msra.mxu0 %v989
    %1512 = vmatprep.subr.bf16.mxu0 %v994
    %1513 = vmatpush1.bf16.msra.mxu0 %v993
    %1514 = vmatprep.subr.bf16.mxu0 %v998
    %1515 = vmatpush1.bf16.msra.mxu0 %v997
    %1516 = vmatprep.subr.bf16.mxu0 %v1002
    %1517 = vmatpush1.bf16.msra.mxu0 %v1001
    %1518 = vmatprep.subr.bf16.mxu0 %v1006
    %1519 = vmatpush1.bf16.msra.mxu0 %v1005
    %1520 = vmatprep.subr.bf16.mxu0 %v1010
    %1521 = vmatpush1.bf16.msra.mxu0 %v1009
    %1522 = vmatprep.subr.bf16.mxu0 %v1014
    %1523 = vmatpush1.bf16.msra.mxu0 %v1013
    %1524 = vmatprep.subr.bf16.mxu0 %v1018
    %1525 = vmatpush1.bf16.msra.mxu0 %v1017
    %1526 = vmatprep.subr.bf16.mxu0 %v1022
    %1527 = vmatpush1.bf16.msra.mxu0 %v1021
    %1528 = vmatprep.mubr.bf16.mxu0 %v297
    %1529 = vmatmul.mubr.bf16.gmra.mrb[0].mxu0 %v296
    %v1530 = vpop.f32.mrb[0].mxu0
    %v1531 = vadd.f32 %v1490, %v1530
    %v1532 = vpop.f32.mrb[0].mxu0
    %v1533 = vadd.f32 %v1492, %v1532
    %v1534 = vpop.f32.mrb[0].mxu0
    %v1535 = vpop.f32.mrb[0].mxu0
    %1536 = vdwg.mxu0
    %1537 = vmatprep.subr.bf16.mxu0 %v1026
    %1538 = vmatpush1.bf16.msra.mxu0 %v1025
    %1539 = vmatprep.subr.bf16.mxu0 %v1030
    %1540 = vmatpush1.bf16.msra.mxu0 %v1029
    %1541 = vmatprep.subr.bf16.mxu0 %v1034
    %1542 = vmatpush1.bf16.msra.mxu0 %v1033
    %1543 = vmatprep.subr.bf16.mxu0 %v1038
    %1544 = vmatpush1.bf16.msra.mxu0 %v1037
    %1545 = vmatprep.subr.bf16.mxu0 %v1042
    %1546 = vmatpush1.bf16.msra.mxu0 %v1041
    %1547 = vmatprep.subr.bf16.mxu0 %v1046
    %1548 = vmatpush1.bf16.msra.mxu0 %v1045
    %1549 = vmatprep.subr.bf16.mxu0 %v1050
    %1550 = vmatpush1.bf16.msra.mxu0 %v1049
    %1551 = vmatprep.subr.bf16.mxu0 %v1054
    %1552 = vmatpush1.bf16.msra.mxu0 %v1053
    %1553 = vmatprep.subr.bf16.mxu0 %v1058
    %1554 = vmatpush1.bf16.msra.mxu0 %v1057
    %1555 = vmatprep.subr.bf16.mxu0 %v1062
    %1556 = vmatpush1.bf16.msra.mxu0 %v1061
    %1557 = vmatprep.subr.bf16.mxu0 %v1066
    %1558 = vmatpush1.bf16.msra.mxu0 %v1065
    %1559 = vmatprep.subr.bf16.mxu0 %v1070
    %1560 = vmatpush1.bf16.msra.mxu0 %v1069
    %1561 = vmatprep.subr.bf16.mxu0 %v1074
    %1562 = vmatpush1.bf16.msra.mxu0 %v1073
    %1563 = vmatprep.subr.bf16.mxu0 %v1078
    %1564 = vmatpush1.bf16.msra.mxu0 %v1077
    %1565 = vmatprep.subr.bf16.mxu0 %v1082
    %1566 = vmatpush1.bf16.msra.mxu0 %v1081
    %1567 = vmatprep.subr.bf16.mxu0 %v1086
    %1568 = vmatpush1.bf16.msra.mxu0 %v1085
    %1569 = vmatprep.mubr.bf16.mxu0 %v299
    %1570 = vmatmul.mubr.bf16.gmra.mrb[0].mxu0 %v298
    %v1571 = vpop.f32.mrb[0].mxu0
    %v1572 = vadd.f32 %v1531, %v1571
    %v1573 = vpop.f32.mrb[0].mxu0
    %v1574 = vadd.f32 %v1533, %v1573
    %v1575 = vpop.f32.mrb[0].mxu0
    %v1576 = vpop.f32.mrb[0].mxu0
    %1577 = vdwg.mxu0
    %1578 = vmatprep.subr.bf16.mxu0 %v1090
    %1579 = vmatpush1.bf16.msra.mxu0 %v1089
    %1580 = vmatprep.subr.bf16.mxu0 0
    %1581 = vmatpush1.bf16.msra.mxu0 0
    %1582 = vmatprep.subr.bf16.mxu0 0
    %1583 = vmatpush1.bf16.msra.mxu0 0
    %1584 = vmatprep.subr.bf16.mxu0 0
    %1585 = vmatpush1.bf16.msra.mxu0 0
    %1586 = vmatprep.subr.bf16.mxu0 0
    %1587 = vmatpush1.bf16.msra.mxu0 0
    %1588 = vmatprep.subr.bf16.mxu0 0
    %1589 = vmatpush1.bf16.msra.mxu0 0
    %1590 = vmatprep.subr.bf16.mxu0 0
    %1591 = vmatpush1.bf16.msra.mxu0 0
    %1592 = vmatprep.subr.bf16.mxu0 0
    %1593 = vmatpush1.bf16.msra.mxu0 0
    %1594 = vmatprep.subr.bf16.mxu0 0
    %1595 = vmatpush1.bf16.msra.mxu0 0
    %1596 = vmatprep.subr.bf16.mxu0 0
    %1597 = vmatpush1.bf16.msra.mxu0 0
    %1598 = vmatprep.subr.bf16.mxu0 0
    %1599 = vmatpush1.bf16.msra.mxu0 0
    %1600 = vmatprep.subr.bf16.mxu0 0
    %1601 = vmatpush1.bf16.msra.mxu0 0
    %1602 = vmatprep.subr.bf16.mxu0 0
    %1603 = vmatpush1.bf16.msra.mxu0 0
    %1604 = vmatprep.subr.bf16.mxu0 0
    %1605 = vmatpush1.bf16.msra.mxu0 0
    %1606 = vmatprep.subr.bf16.mxu0 0
    %1607 = vmatpush1.bf16.msra.mxu0 0
    %1608 = vmatprep.subr.bf16.mxu0 0
    %1609 = vmatpush1.bf16.msra.mxu0 0
    %1610 = vmatprep.mubr.bf16.mxu0 0
    %1611 = vmatmul.mubr.bf16.gmra.mrb[0].mxu0 %v1289
    %v1612 = vpop.f32.mrb[0].mxu0
    %v1613 = vadd.f32 %v1572, %v1612
    %v1614 = vpop.f32.mrb[0].mxu0
    %v1615 = vadd.f32 %v1574, %v1614
    %v1616 = vpop.f32.mrb[0].mxu0
    %v1617 = vpop.f32.mrb[0].mxu0
    %1618 = vdwg.mxu0
    %v1619 = vmax.f32 %v1449, 0.0
    %v1620 = vmax.f32 %v1451, 0.0
    %v1621 = vmax.f32 %v1613, 0.0
    %v1622 = vmax.f32 %v1615, 0.0
    %v1623 = vpack.c.bf16 %v1619, %v1619
    %v1624 = vpack.c.bf16 %v1620, %v1620
    %v1625 = vpack.c.bf16 %v1621, %v1621
    %v1626 = vpack.c.bf16 %v1622, %v1622
    %v1627 = vld [vmem:[#allocation7] sm:$0xf]
    %v1628 = vld [vmem:[#allocation7 + $0x4] sm:$0xf]
    %v1629 = vld [vmem:[#allocation7 + $0x8] sm:$0xf]
    %v1630 = vld [vmem:[#allocation7 + $0xc] sm:$0xf]
    %v1631 = vld [vmem:[#allocation7 + $0x10] sm:$0xf]
    %v1632 = vld [vmem:[#allocation7 + $0x14] sm:$0xf]
    %v1633 = vld [vmem:[#allocation7 + $0x18] sm:$0xf]
    %v1634 = vld [vmem:[#allocation7 + $0x1c] sm:$0xf]
    %v1635 = vld [vmem:[#allocation7 + $0x20] sm:$0xf]
    %v1636 = vld [vmem:[#allocation7 + $0x24] sm:$0xf]
    %v1637 = vld [vmem:[#allocation7 + $0x28] sm:$0xf]
    %v1638 = vld [vmem:[#allocation7 + $0x2c] sm:$0xf]
    %v1639 = vld [vmem:[#allocation7 + $0x30] sm:$0xf]
    %v1640 = vld [vmem:[#allocation7 + $0x34] sm:$0xf]
    %v1641 = vld [vmem:[#allocation7 + $0x38] sm:$0xf]
    %v1642 = vld [vmem:[#allocation7 + $0x3c] sm:$0xf]
    %v1643 = vld [vmem:[#allocation7 + $0x40] sm:$0xf]
    %v1644 = vld [vmem:[#allocation7 + $0x44] sm:$0xf]
    %v1645 = vld [vmem:[#allocation7 + $0x48] sm:$0xf]
    %v1646 = vld [vmem:[#allocation7 + $0x4c] sm:$0xf]
    %v1647 = vld [vmem:[#allocation7 + $0x50] sm:$0xf]
    %v1648 = vld [vmem:[#allocation7 + $0x54] sm:$0xf]
    %v1649 = vld [vmem:[#allocation7 + $0x58] sm:$0xf]
    %v1650 = vld [vmem:[#allocation7 + $0x5c] sm:$0xf]
    %v1651 = vld [vmem:[#allocation7 + $0x60] sm:$0xf]
    %v1652 = vld [vmem:[#allocation7 + $0x64] sm:$0xf]
    %v1653 = vld [vmem:[#allocation7 + $0x68] sm:$0xf]
    %v1654 = vld [vmem:[#allocation7 + $0x6c] sm:$0xf]
    %v1655 = vld [vmem:[#allocation7 + $0x70] sm:$0xf]
    %v1656 = vld [vmem:[#allocation7 + $0x74] sm:$0xf]
    %v1657 = vld [vmem:[#allocation7 + $0x78] sm:$0xf]
    %v1658 = vld [vmem:[#allocation7 + $0x7c] sm:$0xf]
    %v1659 = vld [vmem:[#allocation7 + $0x80] sm:$0xf]
    %v1660 = vld [vmem:[#allocation7 + $0x84] sm:$0xf]
    %v1661 = vld [vmem:[#allocation7 + $0x88] sm:$0xf]
    %v1662 = vld [vmem:[#allocation7 + $0x8c] sm:$0xf]
    %v1663 = vld [vmem:[#allocation7 + $0x90] sm:$0xf]
    %v1664 = vld [vmem:[#allocation7 + $0x94] sm:$0xf]
    %v1665 = vld [vmem:[#allocation7 + $0x98] sm:$0xf]
    %v1666 = vld [vmem:[#allocation7 + $0x9c] sm:$0xf]
    %v1667 = vld [vmem:[#allocation7 + $0xa0] sm:$0xf]
    %v1668 = vld [vmem:[#allocation7 + $0xa4] sm:$0xf]
    %v1669 = vld [vmem:[#allocation7 + $0xa8] sm:$0xf]
    %v1670 = vld [vmem:[#allocation7 + $0xac] sm:$0xf]
    %v1671 = vld [vmem:[#allocation7 + $0xb0] sm:$0xf]
    %v1672 = vld [vmem:[#allocation7 + $0xb4] sm:$0xf]
    %v1673 = vld [vmem:[#allocation7 + $0xb8] sm:$0xf]
    %v1674 = vld [vmem:[#allocation7 + $0xbc] sm:$0xf]
    %v1675 = vld [vmem:[#allocation7 + $0xc0] sm:$0xf]
    %v1676 = vld [vmem:[#allocation7 + $0xc4] sm:$0xf]
    %v1677 = vld [vmem:[#allocation7 + $0xc8] sm:$0xf]
    %v1678 = vld [vmem:[#allocation7 + $0xcc] sm:$0xf]
    %v1679 = vld [vmem:[#allocation7 + $0xd0] sm:$0xf]
    %v1680 = vld [vmem:[#allocation7 + $0xd4] sm:$0xf]
    %v1681 = vld [vmem:[#allocation7 + $0xd8] sm:$0xf]
    %v1682 = vld [vmem:[#allocation7 + $0xdc] sm:$0xf]
    %v1683 = vld [vmem:[#allocation7 + $0xe0] sm:$0xf]
    %v1684 = vld [vmem:[#allocation7 + $0xe4] sm:$0xf]
    %v1685 = vld [vmem:[#allocation7 + $0xe8] sm:$0xf]
    %v1686 = vld [vmem:[#allocation7 + $0xec] sm:$0xf]
    %v1687 = vld [vmem:[#allocation7 + $0xf0] sm:$0xf]
    %v1688 = vld [vmem:[#allocation7 + $0xf4] sm:$0xf]
    %v1689 = vld [vmem:[#allocation7 + $0xf8] sm:$0xf]
    %v1690 = vld [vmem:[#allocation7 + $0xfc] sm:$0xf]
    %v1691 = vld [vmem:[%s4] sm:$0x1]
    %v1693 = vlaneseq
    %v1694 = vshrl.u32 %v1693, 7
    %v1695 = vsub.s32 0, %v1694
    %v1696 = vrot.slane %v1691, %v1695
    %v1762 = vunpack.c.l.b16 %v1627
    %v1763 = vunpack.c.l.b16 %v1628
    %v1764 = vunpack.c.l.b16 %v1629
    %v1765 = vunpack.c.l.b16 %v1630
    %v1766 = vunpack.c.l.b16 %v1631
    %v1767 = vunpack.c.l.b16 %v1632
    %v1768 = vunpack.c.l.b16 %v1633
    %v1769 = vunpack.c.l.b16 %v1634
    %v1770 = vunpack.c.l.b16 %v1635
    %v1771 = vunpack.c.l.b16 %v1636
    %v1772 = vunpack.c.l.b16 %v1637
    %v1773 = vunpack.c.l.b16 %v1638
    %v1774 = vunpack.c.l.b16 %v1639
    %v1775 = vunpack.c.l.b16 %v1640
    %v1776 = vunpack.c.l.b16 %v1641
    %v1777 = vunpack.c.l.b16 %v1642
    %v1778 = vunpack.c.l.b16 %v1643
    %v1779 = vunpack.c.l.b16 %v1644
    %v1780 = vunpack.c.l.b16 %v1645
    %v1781 = vunpack.c.l.b16 %v1646
    %v1782 = vunpack.c.l.b16 %v1647
    %v1783 = vunpack.c.l.b16 %v1648
    %v1784 = vunpack.c.l.b16 %v1649
    %v1785 = vunpack.c.l.b16 %v1650
    %v1786 = vunpack.c.l.b16 %v1651
    %v1787 = vunpack.c.l.b16 %v1652
    %v1788 = vunpack.c.l.b16 %v1653
    %v1789 = vunpack.c.l.b16 %v1654
    %v1790 = vunpack.c.l.b16 %v1655
    %v1791 = vunpack.c.l.b16 %v1656
    %v1792 = vunpack.c.l.b16 %v1657
    %v1793 = vunpack.c.l.b16 %v1658
    %v1794 = vunpack.c.l.b16 %v1659
    %v1795 = vunpack.c.l.b16 %v1660
    %v1796 = vunpack.c.l.b16 %v1661
    %v1797 = vunpack.c.l.b16 %v1662
    %v1798 = vunpack.c.l.b16 %v1663
    %v1799 = vunpack.c.l.b16 %v1664
    %v1800 = vunpack.c.l.b16 %v1665
    %v1801 = vunpack.c.l.b16 %v1666
    %v1802 = vunpack.c.l.b16 %v1667
    %v1803 = vunpack.c.l.b16 %v1668
    %v1804 = vunpack.c.l.b16 %v1669
    %v1805 = vunpack.c.l.b16 %v1670
    %v1806 = vunpack.c.l.b16 %v1671
    %v1807 = vunpack.c.l.b16 %v1672
    %v1808 = vunpack.c.l.b16 %v1673
    %v1809 = vunpack.c.l.b16 %v1674
    %v1810 = vunpack.c.l.b16 %v1675
    %v1811 = vunpack.c.l.b16 %v1676
    %v1812 = vunpack.c.l.b16 %v1677
    %v1813 = vunpack.c.l.b16 %v1678
    %v1814 = vunpack.c.l.b16 %v1679
    %v1815 = vunpack.c.l.b16 %v1680
    %v1816 = vunpack.c.l.b16 %v1681
    %v1817 = vunpack.c.l.b16 %v1682
    %v1818 = vunpack.c.l.b16 %v1683
    %v1819 = vunpack.c.l.b16 %v1684
    %v1820 = vunpack.c.l.b16 %v1685
    %v1821 = vunpack.c.l.b16 %v1686
    %v1822 = vunpack.c.l.b16 %v1687
    %v1823 = vunpack.c.l.b16 %v1688
    %v1824 = vunpack.c.l.b16 %v1689
    %v1825 = vunpack.c.l.b16 %v1690
    %v1826 = vpack.c.b16 %v1763, %v1762
    %v1827 = vpack.c.b16 %v1765, %v1764
    %v1828 = vpack.c.b16 %v1767, %v1766
    %v1829 = vpack.c.b16 %v1769, %v1768
    %v1830 = vpack.c.b16 %v1771, %v1770
    %v1831 = vpack.c.b16 %v1773, %v1772
    %v1832 = vpack.c.b16 %v1775, %v1774
    %v1833 = vpack.c.b16 %v1777, %v1776
    %v1834 = vpack.c.b16 %v1779, %v1778
    %v1835 = vpack.c.b16 %v1781, %v1780
    %v1836 = vpack.c.b16 %v1783, %v1782
    %v1837 = vpack.c.b16 %v1785, %v1784
    %v1838 = vpack.c.b16 %v1787, %v1786
    %v1839 = vpack.c.b16 %v1789, %v1788
    %v1840 = vpack.c.b16 %v1791, %v1790
    %v1841 = vpack.c.b16 %v1793, %v1792
    %v1842 = vpack.c.b16 %v1795, %v1794
    %v1843 = vpack.c.b16 %v1797, %v1796
    %v1844 = vpack.c.b16 %v1799, %v1798
    %v1845 = vpack.c.b16 %v1801, %v1800
    %v1846 = vpack.c.b16 %v1803, %v1802
    %v1847 = vpack.c.b16 %v1805, %v1804
    %v1848 = vpack.c.b16 %v1807, %v1806
    %v1849 = vpack.c.b16 %v1809, %v1808
    %v1850 = vpack.c.b16 %v1811, %v1810
    %v1851 = vpack.c.b16 %v1813, %v1812
    %v1852 = vpack.c.b16 %v1815, %v1814
    %v1853 = vpack.c.b16 %v1817, %v1816
    %v1854 = vpack.c.b16 %v1819, %v1818
    %v1855 = vpack.c.b16 %v1821, %v1820
    %v1856 = vpack.c.b16 %v1823, %v1822
    %v1857 = vpack.c.b16 %v1825, %v1824
    %1890 = vmatprep.subr.bf16.mxu0 0
    %1891 = vmatpush1.bf16.msra.mxu0 %v1826
    %1892 = vmatprep.subr.bf16.mxu0 0
    %1893 = vmatpush1.bf16.msra.mxu0 %v1827
    %1894 = vmatprep.subr.bf16.mxu0 0
    %1895 = vmatpush1.bf16.msra.mxu0 %v1828
    %1896 = vmatprep.subr.bf16.mxu0 0
    %1897 = vmatpush1.bf16.msra.mxu0 %v1829
    %1898 = vmatprep.subr.bf16.mxu0 0
    %1899 = vmatpush1.bf16.msra.mxu0 %v1830
    %1900 = vmatprep.subr.bf16.mxu0 0
    %1901 = vmatpush1.bf16.msra.mxu0 %v1831
    %1902 = vmatprep.subr.bf16.mxu0 0
    %1903 = vmatpush1.bf16.msra.mxu0 %v1832
    %1904 = vmatprep.subr.bf16.mxu0 0
    %1905 = vmatpush1.bf16.msra.mxu0 %v1833
    %1906 = vmatprep.subr.bf16.mxu0 0
    %1907 = vmatpush1.bf16.msra.mxu0 %v1834
    %1908 = vmatprep.subr.bf16.mxu0 0
    %1909 = vmatpush1.bf16.msra.mxu0 %v1835
    %1910 = vmatprep.subr.bf16.mxu0 0
    %1911 = vmatpush1.bf16.msra.mxu0 %v1836
    %1912 = vmatprep.subr.bf16.mxu0 0
    %1913 = vmatpush1.bf16.msra.mxu0 %v1837
    %1914 = vmatprep.subr.bf16.mxu0 0
    %1915 = vmatpush1.bf16.msra.mxu0 %v1838
    %1916 = vmatprep.subr.bf16.mxu0 0
    %1917 = vmatpush1.bf16.msra.mxu0 %v1839
    %1918 = vmatprep.subr.bf16.mxu0 0
    %1919 = vmatpush1.bf16.msra.mxu0 %v1840
    %1920 = vmatprep.subr.bf16.mxu0 0
    %1921 = vmatpush1.bf16.msra.mxu0 %v1841
    %1922 = vmatprep.mubr.bf16.mxu0 %v1624
    %1923 = vmatmul.mubr.bf16.gmra.mrb[0].mxu0 %v1623
    %v1924 = vpop.f32.mrb[0].mxu0
    %v1925 = vadd.f32 %v1696, %v1924
    %v1926 = vpop.f32.mrb[0].mxu0
    %v1927 = vpop.f32.mrb[0].mxu0
    %v1928 = vpop.f32.mrb[0].mxu0
    %1929 = vdwg.mxu0
    %1930 = vmatprep.subr.bf16.mxu0 0
    %1931 = vmatpush1.bf16.msra.mxu0 %v1842
    %1932 = vmatprep.subr.bf16.mxu0 0
    %1933 = vmatpush1.bf16.msra.mxu0 %v1843
    %1934 = vmatprep.subr.bf16.mxu0 0
    %1935 = vmatpush1.bf16.msra.mxu0 %v1844
    %1936 = vmatprep.subr.bf16.mxu0 0
    %1937 = vmatpush1.bf16.msra.mxu0 %v1845
    %1938 = vmatprep.subr.bf16.mxu0 0
    %1939 = vmatpush1.bf16.msra.mxu0 %v1846
    %1940 = vmatprep.subr.bf16.mxu0 0
    %1941 = vmatpush1.bf16.msra.mxu0 %v1847
    %1942 = vmatprep.subr.bf16.mxu0 0
    %1943 = vmatpush1.bf16.msra.mxu0 %v1848
    %1944 = vmatprep.subr.bf16.mxu0 0
    %1945 = vmatpush1.bf16.msra.mxu0 %v1849
    %1946 = vmatprep.subr.bf16.mxu0 0
    %1947 = vmatpush1.bf16.msra.mxu0 %v1850
    %1948 = vmatprep.subr.bf16.mxu0 0
    %1949 = vmatpush1.bf16.msra.mxu0 %v1851
    %1950 = vmatprep.subr.bf16.mxu0 0
    %1951 = vmatpush1.bf16.msra.mxu0 %v1852
    %1952 = vmatprep.subr.bf16.mxu0 0
    %1953 = vmatpush1.bf16.msra.mxu0 %v1853
    %1954 = vmatprep.subr.bf16.mxu0 0
    %1955 = vmatpush1.bf16.msra.mxu0 %v1854
    %1956 = vmatprep.subr.bf16.mxu0 0
    %1957 = vmatpush1.bf16.msra.mxu0 %v1855
    %1958 = vmatprep.subr.bf16.mxu0 0
    %1959 = vmatpush1.bf16.msra.mxu0 %v1856
    %1960 = vmatprep.subr.bf16.mxu0 0
    %1961 = vmatpush1.bf16.msra.mxu0 %v1857
    %1962 = vmatprep.mubr.bf16.mxu0 %v1626
    %1963 = vmatmul.mubr.bf16.gmra.mrb[0].mxu0 %v1625
    %v1964 = vpop.f32.mrb[0].mxu0
    %v1965 = vadd.f32 %v1925, %v1964
    %v1966 = vpop.f32.mrb[0].mxu0
    %v1967 = vpop.f32.mrb[0].mxu0
    %v1968 = vpop.f32.mrb[0].mxu0
    %1969 = vdwg.mxu0
    %1970 = vst [vmem:[#allocation8] sm:$0xff] %v1965
    // Predicated region
    $region34: #{tpu_custom_call.1} parent=1 // pred_check
      _
    $region35: #{tpu_custom_call.1} parent=1 // pred_check_branch
      %1972 = sbr.rel (0) target = $region37
    $region36: #{tpu_custom_call.1} parent=1 // pred_region
      %s1974 = ssub.s32 128, 128
      %1975 = vsyncadd [#allocation4], %s1974
      %s1977 = sshll.u32 [#allocation8], 4
      %s1978 = int_to_ptr.vmem [resolvable:$true] %s1977
      %1980 = dma.vmem_to_hbm [thread:$0]  %s1978, 128, %s5, [#allocation4]
    $region37: #{tpu_custom_call.1} parent=1 // pred_fallthru
      _
    // Predicated region
    $region38: #{tpu_custom_call.1} parent=1 // pred_check
      _
    $region39: #{tpu_custom_call.1} parent=1 // pred_check_branch
      %1982 = sbr.rel (0) target = $region41
    $region40: #{tpu_custom_call.1} parent=1 // pred_region
      %1983 = dma.done [#allocation4], 128
    $region41: #{tpu_custom_call.1} parent=1 // pred_fallthru
      _
    %1984 = vsyncpa [#allocation3], 1
    %1985 = vsyncpa [#allocation6], 1
    %1986 = vsyncpa [#allocation4], 1

</llo_original>
